<compile_context>
chip_gen: v7x
topology: tpu7x:2x2x1
jax: 0.10.0
libtpu: 0.0.40
codegen_flags: <defaults>
</compile_context>

<pallas_src>
import functools
import math

import jax
import jax.numpy as jnp
from jax.experimental import pallas as pl
from jax.experimental.pallas import tpu as pltpu

LN_EPS = 1e-12  # HF DeiT default layer_norm_eps (effectively ~0 in f32).


# ----------------------------- in-kernel helpers -----------------------------

def _layernorm(x, g, b):
    mu = jnp.mean(x, axis=-1, keepdims=True)
    var = jnp.mean((x - mu) ** 2, axis=-1, keepdims=True)
    return (x - mu) * jax.lax.rsqrt(var + LN_EPS) * g + b


def _gelu_tanh(x):
    # tanh-approximate GELU: the tanh lands on the EUP slot instead of ~12
    # serial VALU ops per element of the (S, Dm) MLP activation.
    c = 0.7978845608028654  # sqrt(2/pi)
    return 0.5 * x * (1.0 + jnp.tanh(c * (x + 0.044715 * x * x * x)))


# --------------------------------- kernel ------------------------------------

def _audio_deit_encoder_kernel(
        patches_ref, pos_ref, pw_ref, pb_ref,
        ln1g_ref, ln1b_ref,
        wq_ref, bq_ref, wk_ref, bk_ref, wv_ref, bv_ref, wo_ref, bo_ref,
        ln2g_ref, ln2b_ref, wi_ref, bi_ref, wo2_ref, bo2_ref,
        lnf_g_ref, lnf_b_ref,
        out_ref, x_sc, *, num_heads):
    layer = pl.program_id(1)
    num_layers = pl.num_programs(1)

    # ---- layer-0 prologue: fused patch embedding + positional encoding ----
    @pl.when(layer == 0)
    def _():
        emb = jnp.dot(patches_ref[...].astype(jnp.bfloat16), pw_ref[...],
                      preferred_element_type=jnp.float32)
        x_sc[...] = emb + pb_ref[...] + pos_ref[...]

    x = x_sc[...]                                   # (S, D) f32 residual stream
    S, D = x.shape
    hd = D // num_heads
    scale = 1.0 / math.sqrt(hd)

    # ---------------- self-attention block (pre-LN, residual) ----------------
    h = _layernorm(x, ln1g_ref[...], ln1b_ref[...]).astype(jnp.bfloat16)
    hb = jnp.broadcast_to(h, (num_heads, S, D))     # batch over heads

    qh = jnp.einsum("hsd,hde->hse", hb, wq_ref[...],
                    preferred_element_type=jnp.float32) + bq_ref[...]
    kh = jnp.einsum("hsd,hde->hse", hb, wk_ref[...],
                    preferred_element_type=jnp.float32) + bk_ref[...]
    vh = jnp.einsum("hsd,hde->hse", hb, wv_ref[...],
                    preferred_element_type=jnp.float32) + bv_ref[...]

    qh = (qh * scale).astype(jnp.bfloat16)          # fold 1/sqrt(hd) into q
    kh = kh.astype(jnp.bfloat16)
    vh = vh.astype(jnp.bfloat16)

    s = jnp.einsum("hqe,hke->hqk", qh, kh,
                   preferred_element_type=jnp.float32)          # (NH, S, S)
    s = s - jnp.max(s, axis=-1, keepdims=True)
    e = jnp.exp(s)
    p = e * pl.reciprocal(jnp.sum(e, axis=-1, keepdims=True), approx=True)

    ctx = jnp.einsum("hqk,hke->hqe", p.astype(jnp.bfloat16), vh,
                     preferred_element_type=jnp.float32)        # (NH, S, hd)
    attn = jnp.sum(
        jnp.einsum("hse,hed->hsd", ctx.astype(jnp.bfloat16), wo_ref[...],
                   preferred_element_type=jnp.float32),
        axis=0) + bo_ref[...]                                   # (S, D)
    x1 = x + attn

    # ---------------- MLP block (pre-LN, GELU, residual) ----------------
    h2 = _layernorm(x1, ln2g_ref[...], ln2b_ref[...]).astype(jnp.bfloat16)
    m = jnp.dot(h2, wi_ref[...], preferred_element_type=jnp.float32) + bi_ref[...]
    m = _gelu_tanh(m)
    m = jnp.dot(m.astype(jnp.bfloat16), wo2_ref[...],
                preferred_element_type=jnp.float32) + bo2_ref[...]
    x2 = x1 + m

    x_sc[...] = x2

    # ---- final epilogue: fused final LayerNorm, single HBM writeback ----
    @pl.when(layer == num_layers - 1)
    def _():
        out_ref[0] = _layernorm(x2, lnf_g_ref[...], lnf_b_ref[...]
                                ).astype(out_ref.dtype)


# --------------------------------- wrapper -----------------------------------

def audio_deit_encoder(patches, pos, params, *, num_heads):
    B, S, PP = patches.shape
    L, D, Dm = params["wi"].shape
    hd = D // num_heads
    assert D % num_heads == 0

    def const(*shape):
        n = len(shape)
        return pl.BlockSpec(shape, lambda b, l, _n=n: (0,) * _n)

    def per_layer(*shape):
        n = len(shape)
        return pl.BlockSpec((None,) + shape, lambda b, l, _n=n: (l,) + (0,) * _n)

    in_specs = [
        pl.BlockSpec((None, S, PP), lambda b, l: (b, 0, 0)),   # patches (per batch)
        const(S, D),                                           # positional encoding
        const(PP, D), const(1, D),                             # patch projection
        per_layer(1, D), per_layer(1, D),                      # ln1
        per_layer(num_heads, D, hd), per_layer(num_heads, 1, hd),   # q
        per_layer(num_heads, D, hd), per_layer(num_heads, 1, hd),   # k
        per_layer(num_heads, D, hd), per_layer(num_heads, 1, hd),   # v
        per_layer(num_heads, hd, D), per_layer(1, D),          # attn out proj
        per_layer(1, D), per_layer(1, D),                      # ln2
        per_layer(D, Dm), per_layer(1, Dm),                    # mlp in
        per_layer(Dm, D), per_layer(1, D),                     # mlp out
        const(1, D), const(1, D),                              # final layernorm
    ]

    operands = (patches, pos, params["patch_w"], params["patch_b"],
                params["ln1g"], params["ln1b"],
                params["wq"], params["bq"], params["wk"], params["bk"],
                params["wv"], params["bv"], params["wo"], params["bo"],
                params["ln2g"], params["ln2b"],
                params["wi"], params["bi"], params["wo2"], params["bo2"],
                params["ln_g"], params["ln_b"])

    flops = int(B * (2 * S * PP * D
                     + L * (8 * S * D * D + 4 * S * S * D + 4 * S * D * Dm)))
    transcendentals = int(B * L * (S * Dm + num_heads * S * S + num_heads * S))
    bytes_accessed = int(sum(int(a.size) * a.dtype.itemsize for a in operands)
                         + B * S * D * 4)

    return pl.pallas_call(
        functools.partial(_audio_deit_encoder_kernel, num_heads=num_heads),
        out_shape=jax.ShapeDtypeStruct((B, S, D), jnp.float32),
        grid=(B, L),
        in_specs=in_specs,
        out_specs=pl.BlockSpec((1, S, D), lambda b, l: (b, 0, 0)),
        scratch_shapes=[pltpu.VMEM((S, D), jnp.float32)],   # resident residual stream
        compiler_params=pltpu.CompilerParams(
            dimension_semantics=("parallel", "arbitrary"),
            # Above the 16/32 MiB scoped defaults, below every generation's
            # physical VMEM (incl. v7x's 64 MiB).
            vmem_limit_bytes=48 * 1024 * 1024),
        cost_estimate=pl.CostEstimate(flops=flops,
                                      transcendentals=transcendentals,
                                      bytes_accessed=bytes_accessed),
    )(*operands)


# ---------------------------- model-level glue --------------------------------

def sinusoidal_positional_encoding(seq_len, d_model):
    pos = jnp.arange(seq_len, dtype=jnp.float32)[:, None]
    i = jnp.arange(0, d_model, 2, dtype=jnp.float32)[None, :]
    div = jnp.exp(-math.log(10000.0) * i / d_model)
    pe = jnp.zeros((seq_len, d_model), jnp.float32)
    pe = pe.at[:, 0::2].set(jnp.sin(pos * div))
    pe = pe.at[:, 1::2].set(jnp.cos(pos * div))
    return pe


def audio_deit_forward(spectral, params, *, patch_size, num_heads):
    B, C, H, W = spectral.shape
    assert C == 1, "AudioDeiT patch embedding expects a single input channel"
    P = patch_size
    Ht, Wt = H // P, W // P
    S = Ht * Wt
    D = params["patch_b"].shape[-1]

    # Conv2d(1, D, kernel=stride=P) == per-patch matmul: patch extraction is
    # pure layout glue in plain JAX; the matmul itself runs in the kernel.
    patches = spectral.reshape(B, 1, Ht, P, Wt, P)
    patches = patches.transpose(0, 2, 4, 1, 3, 5).reshape(B, S, P * P)

    num_patch_in_time = Ht  # embeddings.size(-2) of the (B, D, Ht, Wt) conv output

    pos = sinusoidal_positional_encoding(S, D)      # (S, D), broadcast in-kernel

    x = audio_deit_encoder(patches, pos, params, num_heads=num_heads)  # (B, S, D)

    # sequence_output.unflatten(-2, (Ht, -1)).flatten(2).unsqueeze(1)
    return x.reshape(B, num_patch_in_time, Wt * D)[:, None, :, :]


def init_params(key, *, patch_size, hidden, mlp_dim, num_layers, num_heads):
    PP = patch_size * patch_size
    D, Dm, L, NH = hidden, mlp_dim, num_layers, num_heads
    hd = D // NH

    def normal(k, shape, dtype=jnp.bfloat16, scale=0.02):
        return (scale * jax.random.normal(k, shape, jnp.float32)).astype(dtype)

    ks = jax.random.split(key, 14)
    # Per-head weight layouts are just reshaped views of the dense matrices:
    # Wq (D, D) -> (D, NH, hd) -> (NH, D, hd); Wo (D, D) -> (NH, hd, D).
    return {
        "patch_w": normal(ks[0], (PP, D)),                     # bf16 matmul weight
        "patch_b": normal(ks[1], (1, D), jnp.float32),
        "ln_g": jnp.ones((1, D), jnp.float32),
        "ln_b": jnp.zeros((1, D), jnp.float32),
        # stacked per-layer params (leading L axis = layer grid dimension)
        "ln1g": jnp.ones((L, 1, D), jnp.float32),
        "ln1b": jnp.zeros((L, 1, D), jnp.float32),
        "ln2g": jnp.ones((L, 1, D), jnp.float32),
        "ln2b": jnp.zeros((L, 1, D), jnp.float32),
        "wq": normal(ks[2], (L, NH, D, hd)),
        "bq": normal(ks[3], (L, NH, 1, hd), jnp.float32),
        "wk": normal(ks[4], (L, NH, D, hd)),
        "bk": normal(ks[5], (L, NH, 1, hd), jnp.float32),
        "wv": normal(ks[6], (L, NH, D, hd)),
        "bv": normal(ks[7], (L, NH, 1, hd), jnp.float32),
        "wo": normal(ks[8], (L, NH, hd, D)),
        "bo": normal(ks[9], (L, 1, D), jnp.float32),
        "wi": normal(ks[10], (L, D, Dm)),
        "bi": normal(ks[11], (L, 1, Dm), jnp.float32),
        "wo2": normal(ks[12], (L, Dm, D)),
        "bo2": normal(ks[13], (L, 1, D), jnp.float32),
    }


if __name__ == "__main__":
    key = jax.random.PRNGKey(0)
    B, H, W = 2, 32, 16                  # spectral: (B, 1, H, W), NCHW like PyTorch
    P, D, NH, L, DM = 8, 128, 2, 2, 256  # D multiple of 128 -> lane-dense output

    kx, kp = jax.random.split(key)
    spectral = jax.random.normal(kx, (B, 1, H, W), jnp.float32)
    params = init_params(kp, patch_size=P, hidden=D, mlp_dim=DM,
                         num_layers=L, num_heads=NH)

    out = audio_deit_forward(spectral, params, patch_size=P, num_heads=NH)
    out = jax.block_until_ready(out)

    Ht, Wt = H // P, W // P
    assert out.shape == (B, 1, Ht, Wt * D), out.shape
    assert bool(jnp.all(jnp.isfinite(out)))
    print("KERNEL_OK")
</pallas_src>

<mosaic_0001>
module attributes {stable_mosaic.version = 11 : i64} {
  func.func @_audio_deit_encoder_kernel(%arg0: i32, %arg1: i32, %arg2: memref<1x8x64xf32, #tpu.memory_space<vmem>>, %arg3: memref<8x128xf32, #tpu.memory_space<vmem>>, %arg4: memref<64x128xbf16, #tpu.memory_space<vmem>>, %arg5: memref<1x128xf32, #tpu.memory_space<vmem>>, %arg6: memref<1x1x128xf32, #tpu.memory_space<vmem>>, %arg7: memref<1x1x128xf32, #tpu.memory_space<vmem>>, %arg8: memref<1x2x128x64xbf16, #tpu.memory_space<vmem>>, %arg9: memref<1x2x1x64xf32, #tpu.memory_space<vmem>>, %arg10: memref<1x2x128x64xbf16, #tpu.memory_space<vmem>>, %arg11: memref<1x2x1x64xf32, #tpu.memory_space<vmem>>, %arg12: memref<1x2x128x64xbf16, #tpu.memory_space<vmem>>, %arg13: memref<1x2x1x64xf32, #tpu.memory_space<vmem>>, %arg14: memref<1x2x64x128xbf16, #tpu.memory_space<vmem>>, %arg15: memref<1x1x128xf32, #tpu.memory_space<vmem>>, %arg16: memref<1x1x128xf32, #tpu.memory_space<vmem>>, %arg17: memref<1x1x128xf32, #tpu.memory_space<vmem>>, %arg18: memref<1x128x256xbf16, #tpu.memory_space<vmem>>, %arg19: memref<1x1x256xf32, #tpu.memory_space<vmem>>, %arg20: memref<1x256x128xbf16, #tpu.memory_space<vmem>>, %arg21: memref<1x1x128xf32, #tpu.memory_space<vmem>>, %arg22: memref<1x128xf32, #tpu.memory_space<vmem>>, %arg23: memref<1x128xf32, #tpu.memory_space<vmem>>, %arg24: memref<1x8x128xf32, #tpu.memory_space<vmem>>, %arg25: memref<8x128xf32, #tpu.memory_space<vmem>>) attributes {dimension_semantics = [#tpu.dimension_semantics<parallel>, #tpu.dimension_semantics<arbitrary>], iteration_bounds = array<i64: 2, 2>, scalar_prefetch = 0 : i64, scratch_operands = 1 : i64, tpu.core_type = #tpu.core_type<tc>, window_params = [{transform_indices = @transform_0, window_bounds = array<i64: 1, 8, 64>}, {pipeline_mode = #tpu.pipeline_mode<synchronous>, transform_indices = @transform_1, window_bounds = array<i64: 8, 128>}, {pipeline_mode = #tpu.pipeline_mode<synchronous>, transform_indices = @transform_2, window_bounds = array<i64: 64, 128>}, {pipeline_mode = #tpu.pipeline_mode<synchronous>, transform_indices = @transform_3, window_bounds = array<i64: 1, 128>}, {transform_indices = @transform_4, window_bounds = array<i64: 1, 1, 128>}, {transform_indices = @transform_5, window_bounds = array<i64: 1, 1, 128>}, {transform_indices = @transform_6, window_bounds = array<i64: 1, 2, 128, 64>}, {transform_indices = @transform_7, window_bounds = array<i64: 1, 2, 1, 64>}, {transform_indices = @transform_8, window_bounds = array<i64: 1, 2, 128, 64>}, {transform_indices = @transform_9, window_bounds = array<i64: 1, 2, 1, 64>}, {transform_indices = @transform_10, window_bounds = array<i64: 1, 2, 128, 64>}, {transform_indices = @transform_11, window_bounds = array<i64: 1, 2, 1, 64>}, {transform_indices = @transform_12, window_bounds = array<i64: 1, 2, 64, 128>}, {transform_indices = @transform_13, window_bounds = array<i64: 1, 1, 128>}, {transform_indices = @transform_14, window_bounds = array<i64: 1, 1, 128>}, {transform_indices = @transform_15, window_bounds = array<i64: 1, 1, 128>}, {transform_indices = @transform_16, window_bounds = array<i64: 1, 128, 256>}, {transform_indices = @transform_17, window_bounds = array<i64: 1, 1, 256>}, {transform_indices = @transform_18, window_bounds = array<i64: 1, 256, 128>}, {transform_indices = @transform_19, window_bounds = array<i64: 1, 1, 128>}, {pipeline_mode = #tpu.pipeline_mode<synchronous>, transform_indices = @transform_20, window_bounds = array<i64: 1, 128>}, {pipeline_mode = #tpu.pipeline_mode<synchronous>, transform_indices = @transform_21, window_bounds = array<i64: 1, 128>}, {transform_indices = @transform_22, window_bounds = array<i64: 1, 8, 128>}]} {
    %c0_i32 = arith.constant 0 : i32
    %0 = arith.cmpi eq, %arg1, %c0_i32 : i32
    %1 = arith.extui %0 : i1 to i32
    %c0_i32_0 = arith.constant 0 : i32
    %2 = arith.cmpi ne, %1, %c0_i32_0 : i32
    scf.if %2 {
      %c0_85 = arith.constant 0 : index
      %c0_86 = arith.constant 0 : index
      %c0_87 = arith.constant 0 : index
      %142 = vector.load %arg2[%c0_85, %c0_86, %c0_87] : memref<1x8x64xf32, #tpu.memory_space<vmem>>, vector<1x8x64xf32>
      %143 = vector.shape_cast %142 : vector<1x8x64xf32> to vector<8x64xf32>
      %144 = arith.truncf %143 : vector<8x64xf32> to vector<8x64xbf16>
      %c0_88 = arith.constant 0 : index
      %c0_89 = arith.constant 0 : index
      %145 = vector.load %arg4[%c0_88, %c0_89] : memref<64x128xbf16, #tpu.memory_space<vmem>>, vector<64x128xbf16>
      %cst_90 = arith.constant dense<0.000000e+00> : vector<8x128xf32>
      %146 = tpu.matmul %144, %145, %cst_90 {dimension_numbers = #tpu.dot_dimension_numbers<[1], [0], [0], [1], [0, 0, 1, 1], [], []>} : vector<8x64xbf16>, vector<64x128xbf16>, vector<8x128xf32> -> vector<8x128xf32>
      %c0_91 = arith.constant 0 : index
      %c0_92 = arith.constant 0 : index
      %147 = vector.load %arg5[%c0_91, %c0_92] : memref<1x128xf32, #tpu.memory_space<vmem>>, vector<1x128xf32>
      %148 = vector.broadcast %147 : vector<1x128xf32> to vector<8x128xf32>
      %149 = arith.addf %146, %148 : vector<8x128xf32>
      %c0_93 = arith.constant 0 : index
      %c0_94 = arith.constant 0 : index
      %150 = vector.load %arg3[%c0_93, %c0_94] : memref<8x128xf32, #tpu.memory_space<vmem>>, vector<8x128xf32>
      %151 = arith.addf %149, %150 : vector<8x128xf32>
      %c0_95 = arith.constant 0 : index
      %c0_96 = arith.constant 0 : index
      %152 = vector.load %arg25[%c0_95, %c0_96] : memref<8x128xf32, #tpu.memory_space<vmem>>, vector<8x128xf32>
      tpu.vector_store %arg25[%c0_95, %c0_96], %151 {strides = array<i32>} : memref<8x128xf32, #tpu.memory_space<vmem>>, vector<8x128xf32>,
    } else {
    }
    %c0 = arith.constant 0 : index
    %c0_1 = arith.constant 0 : index
    %3 = vector.load %arg25[%c0, %c0_1] : memref<8x128xf32, #tpu.memory_space<vmem>>, vector<8x128xf32>
    %c0_2 = arith.constant 0 : index
    %c0_3 = arith.constant 0 : index
    %c0_4 = arith.constant 0 : index
    %4 = vector.load %arg6[%c0_2, %c0_3, %c0_4] : memref<1x1x128xf32, #tpu.memory_space<vmem>>, vector<1x1x128xf32>
    %5 = vector.shape_cast %4 : vector<1x1x128xf32> to vector<1x128xf32>
    %c0_5 = arith.constant 0 : index
    %c0_6 = arith.constant 0 : index
    %c0_7 = arith.constant 0 : index
    %6 = vector.load %arg7[%c0_5, %c0_6, %c0_7] : memref<1x1x128xf32, #tpu.memory_space<vmem>>, vector<1x1x128xf32>
    %7 = vector.shape_cast %6 : vector<1x1x128xf32> to vector<1x128xf32>
    %cst = arith.constant dense<0.000000e+00> : vector<8xf32>
    %8 = vector.multi_reduction <add>, %3, %cst [1] : vector<8x128xf32> to vector<8xf32>
    %9 = vector.shape_cast %8 : vector<8xf32> to vector<8x1xf32>
    %cst_8 = arith.constant 1.280000e+02 : f32
    %10 = vector.broadcast %cst_8 : f32 to vector<8x1xf32>
    %11 = arith.divf %9, %10 : vector<8x1xf32>
    %12 = vector.broadcast %11 : vector<8x1xf32> to vector<8x128xf32>
    %13 = arith.subf %3, %12 : vector<8x128xf32>
    %14 = arith.mulf %13, %13 : vector<8x128xf32>
    %cst_9 = arith.constant dense<0.000000e+00> : vector<8xf32>
    %15 = vector.multi_reduction <add>, %14, %cst_9 [1] : vector<8x128xf32> to vector<8xf32>
    %16 = vector.shape_cast %15 : vector<8xf32> to vector<8x1xf32>
    %cst_10 = arith.constant 1.280000e+02 : f32
    %17 = vector.broadcast %cst_10 : f32 to vector<8x1xf32>
    %18 = arith.divf %16, %17 : vector<8x1xf32>
    %19 = vector.broadcast %11 : vector<8x1xf32> to vector<8x128xf32>
    %20 = arith.subf %3, %19 : vector<8x128xf32>
    %cst_11 = arith.constant 9.99999996E-13 : f32
    %21 = vector.broadcast %cst_11 : f32 to vector<8x1xf32>
    %22 = arith.addf %18, %21 : vector<8x1xf32>
    %23 = math.rsqrt %22 : vector<8x1xf32>
    %24 = vector.broadcast %23 : vector<8x1xf32> to vector<8x128xf32>
    %25 = arith.mulf %20, %24 : vector<8x128xf32>
    %26 = vector.broadcast %5 : vector<1x128xf32> to vector<8x128xf32>
    %27 = arith.mulf %25, %26 : vector<8x128xf32>
    %28 = vector.broadcast %7 : vector<1x128xf32> to vector<8x128xf32>
    %29 = arith.addf %27, %28 : vector<8x128xf32>
    %30 = arith.truncf %29 : vector<8x128xf32> to vector<8x128xbf16>
    %31 = vector.shape_cast %30 : vector<8x128xbf16> to vector<1x8x128xbf16>
    %32 = vector.broadcast %31 : vector<1x8x128xbf16> to vector<2x8x128xbf16>
    %c0_12 = arith.constant 0 : index
    %c0_13 = arith.constant 0 : index
    %c0_14 = arith.constant 0 : index
    %c0_15 = arith.constant 0 : index
    %33 = vector.load %arg8[%c0_12, %c0_13, %c0_14, %c0_15] : memref<1x2x128x64xbf16, #tpu.memory_space<vmem>>, vector<1x2x128x64xbf16>
    %34 = vector.shape_cast %33 : vector<1x2x128x64xbf16> to vector<2x128x64xbf16>
    "tpu.trace_start"() <{level = 10 : i32, message = "hsd,hde->hse"}> : () -> ()
    %cst_16 = arith.constant dense<0.000000e+00> : vector<2x8x64xf32>
    %35 = tpu.matmul %32, %34, %cst_16 {dimension_numbers = #tpu.dot_dimension_numbers<[2], [1], [1], [2], [0, 0, 0, 1, 1, 2], [0], [0]>} : vector<2x8x128xbf16>, vector<2x128x64xbf16>, vector<2x8x64xf32> -> vector<2x8x64xf32>
    "tpu.trace_stop"() : () -> ()
    %c0_17 = arith.constant 0 : index
    %c0_18 = arith.constant 0 : index
    %c0_19 = arith.constant 0 : index
    %c0_20 = arith.constant 0 : index
    %36 = vector.load %arg9[%c0_17, %c0_18, %c0_19, %c0_20] : memref<1x2x1x64xf32, #tpu.memory_space<vmem>>, vector<1x2x1x64xf32>
    %37 = vector.shape_cast %36 : vector<1x2x1x64xf32> to vector<2x1x64xf32>
    %38 = vector.broadcast %37 : vector<2x1x64xf32> to vector<2x8x64xf32>
    %39 = arith.addf %35, %38 : vector<2x8x64xf32>
    %c0_21 = arith.constant 0 : index
    %c0_22 = arith.constant 0 : index
    %c0_23 = arith.constant 0 : index
    %c0_24 = arith.constant 0 : index
    %40 = vector.load %arg10[%c0_21, %c0_22, %c0_23, %c0_24] : memref<1x2x128x64xbf16, #tpu.memory_space<vmem>>, vector<1x2x128x64xbf16>
    %41 = vector.shape_cast %40 : vector<1x2x128x64xbf16> to vector<2x128x64xbf16>
    "tpu.trace_start"() <{level = 10 : i32, message = "hsd,hde->hse"}> : () -> ()
    %cst_25 = arith.constant dense<0.000000e+00> : vector<2x8x64xf32>
    %42 = tpu.matmul %32, %41, %cst_25 {dimension_numbers = #tpu.dot_dimension_numbers<[2], [1], [1], [2], [0, 0, 0, 1, 1, 2], [0], [0]>} : vector<2x8x128xbf16>, vector<2x128x64xbf16>, vector<2x8x64xf32> -> vector<2x8x64xf32>
    "tpu.trace_stop"() : () -> ()
    %c0_26 = arith.constant 0 : index
    %c0_27 = arith.constant 0 : index
    %c0_28 = arith.constant 0 : index
    %c0_29 = arith.constant 0 : index
    %43 = vector.load %arg11[%c0_26, %c0_27, %c0_28, %c0_29] : memref<1x2x1x64xf32, #tpu.memory_space<vmem>>, vector<1x2x1x64xf32>
    %44 = vector.shape_cast %43 : vector<1x2x1x64xf32> to vector<2x1x64xf32>
    %45 = vector.broadcast %44 : vector<2x1x64xf32> to vector<2x8x64xf32>
    %46 = arith.addf %42, %45 : vector<2x8x64xf32>
    %c0_30 = arith.constant 0 : index
    %c0_31 = arith.constant 0 : index
    %c0_32 = arith.constant 0 : index
    %c0_33 = arith.constant 0 : index
    %47 = vector.load %arg12[%c0_30, %c0_31, %c0_32, %c0_33] : memref<1x2x128x64xbf16, #tpu.memory_space<vmem>>, vector<1x2x128x64xbf16>
    %48 = vector.shape_cast %47 : vector<1x2x128x64xbf16> to vector<2x128x64xbf16>
    "tpu.trace_start"() <{level = 10 : i32, message = "hsd,hde->hse"}> : () -> ()
    %cst_34 = arith.constant dense<0.000000e+00> : vector<2x8x64xf32>
    %49 = tpu.matmul %32, %48, %cst_34 {dimension_numbers = #tpu.dot_dimension_numbers<[2], [1], [1], [2], [0, 0, 0, 1, 1, 2], [0], [0]>} : vector<2x8x128xbf16>, vector<2x128x64xbf16>, vector<2x8x64xf32> -> vector<2x8x64xf32>
    "tpu.trace_stop"() : () -> ()
    %c0_35 = arith.constant 0 : index
    %c0_36 = arith.constant 0 : index
    %c0_37 = arith.constant 0 : index
    %c0_38 = arith.constant 0 : index
    %50 = vector.load %arg13[%c0_35, %c0_36, %c0_37, %c0_38] : memref<1x2x1x64xf32, #tpu.memory_space<vmem>>, vector<1x2x1x64xf32>
    %51 = vector.shape_cast %50 : vector<1x2x1x64xf32> to vector<2x1x64xf32>
    %52 = vector.broadcast %51 : vector<2x1x64xf32> to vector<2x8x64xf32>
    %53 = arith.addf %49, %52 : vector<2x8x64xf32>
    %cst_39 = arith.constant 1.250000e-01 : f32
    %54 = vector.broadcast %cst_39 : f32 to vector<2x8x64xf32>
    %55 = arith.mulf %39, %54 : vector<2x8x64xf32>
    %56 = arith.truncf %55 : vector<2x8x64xf32> to vector<2x8x64xbf16>
    %57 = arith.truncf %46 : vector<2x8x64xf32> to vector<2x8x64xbf16>
    %58 = arith.truncf %53 : vector<2x8x64xf32> to vector<2x8x64xbf16>
    "tpu.trace_start"() <{level = 10 : i32, message = "hqe,hke->hqk"}> : () -> ()
    %cst_40 = arith.constant dense<0.000000e+00> : vector<2x8x8xf32>
    %59 = tpu.matmul %56, %57, %cst_40 {dimension_numbers = #tpu.dot_dimension_numbers<[2], [2], [1], [1], [0, 0, 0, 1, 1, 1], [0], [0]>} : vector<2x8x64xbf16>, vector<2x8x64xbf16>, vector<2x8x8xf32> -> vector<2x8x8xf32>
    "tpu.trace_stop"() : () -> ()
    %cst_41 = arith.constant dense<0xFF800000> : vector<2x8xf32>
    %60 = vector.multi_reduction <maximumf>, %59, %cst_41 [2] : vector<2x8x8xf32> to vector<2x8xf32>
    %61 = vector.shape_cast %60 : vector<2x8xf32> to vector<2x8x1xf32>
    %62 = vector.broadcast %61 : vector<2x8x1xf32> to vector<2x8x8xf32>
    %63 = arith.subf %59, %62 : vector<2x8x8xf32>
    %64 = math.exp %63 : vector<2x8x8xf32>
    %cst_42 = arith.constant dense<0.000000e+00> : vector<2x8xf32>
    %65 = vector.multi_reduction <add>, %64, %cst_42 [2] : vector<2x8x8xf32> to vector<2x8xf32>
    %66 = vector.shape_cast %65 : vector<2x8xf32> to vector<2x8x1xf32>
    %67 = tpu.reciprocal %66 {approx = true} : vector<2x8x1xf32> -> vector<2x8x1xf32>
    %68 = vector.broadcast %67 : vector<2x8x1xf32> to vector<2x8x8xf32>
    %69 = arith.mulf %64, %68 : vector<2x8x8xf32>
    %70 = arith.truncf %69 : vector<2x8x8xf32> to vector<2x8x8xbf16>
    "tpu.trace_start"() <{level = 10 : i32, message = "hqk,hke->hqe"}> : () -> ()
    %cst_43 = arith.constant dense<0.000000e+00> : vector<2x8x64xf32>
    %71 = tpu.matmul %70, %58, %cst_43 {dimension_numbers = #tpu.dot_dimension_numbers<[2], [1], [1], [2], [0, 0, 0, 1, 1, 2], [0], [0]>} : vector<2x8x8xbf16>, vector<2x8x64xbf16>, vector<2x8x64xf32> -> vector<2x8x64xf32>
    "tpu.trace_stop"() : () -> ()
    %72 = arith.truncf %71 : vector<2x8x64xf32> to vector<2x8x64xbf16>
    %c0_44 = arith.constant 0 : index
    %c0_45 = arith.constant 0 : index
    %c0_46 = arith.constant 0 : index
    %c0_47 = arith.constant 0 : index
    %73 = vector.load %arg14[%c0_44, %c0_45, %c0_46, %c0_47] : memref<1x2x64x128xbf16, #tpu.memory_space<vmem>>, vector<1x2x64x128xbf16>
    %74 = vector.shape_cast %73 : vector<1x2x64x128xbf16> to vector<2x64x128xbf16>
    "tpu.trace_start"() <{level = 10 : i32, message = "hse,hed->hsd"}> : () -> ()
    %cst_48 = arith.constant dense<0.000000e+00> : vector<2x8x128xf32>
    %75 = tpu.matmul %72, %74, %cst_48 {dimension_numbers = #tpu.dot_dimension_numbers<[2], [1], [1], [2], [0, 0, 0, 1, 1, 2], [0], [0]>} : vector<2x8x64xbf16>, vector<2x64x128xbf16>, vector<2x8x128xf32> -> vector<2x8x128xf32>
    "tpu.trace_stop"() : () -> ()
    %cst_49 = arith.constant dense<0.000000e+00> : vector<8x128xf32>
    %76 = vector.multi_reduction <add>, %75, %cst_49 [0] : vector<2x8x128xf32> to vector<8x128xf32>
    %c0_50 = arith.constant 0 : index
    %c0_51 = arith.constant 0 : index
    %c0_52 = arith.constant 0 : index
    %77 = vector.load %arg15[%c0_50, %c0_51, %c0_52] : memref<1x1x128xf32, #tpu.memory_space<vmem>>, vector<1x1x128xf32>
    %78 = vector.shape_cast %77 : vector<1x1x128xf32> to vector<1x128xf32>
    %79 = vector.broadcast %78 : vector<1x128xf32> to vector<8x128xf32>
    %80 = arith.addf %76, %79 : vector<8x128xf32>
    %81 = arith.addf %3, %80 : vector<8x128xf32>
    %c0_53 = arith.constant 0 : index
    %c0_54 = arith.constant 0 : index
    %c0_55 = arith.constant 0 : index
    %82 = vector.load %arg16[%c0_53, %c0_54, %c0_55] : memref<1x1x128xf32, #tpu.memory_space<vmem>>, vector<1x1x128xf32>
    %83 = vector.shape_cast %82 : vector<1x1x128xf32> to vector<1x128xf32>
    %c0_56 = arith.constant 0 : index
    %c0_57 = arith.constant 0 : index
    %c0_58 = arith.constant 0 : index
    %84 = vector.load %arg17[%c0_56, %c0_57, %c0_58] : memref<1x1x128xf32, #tpu.memory_space<vmem>>, vector<1x1x128xf32>
    %85 = vector.shape_cast %84 : vector<1x1x128xf32> to vector<1x128xf32>
    %cst_59 = arith.constant dense<0.000000e+00> : vector<8xf32>
    %86 = vector.multi_reduction <add>, %81, %cst_59 [1] : vector<8x128xf32> to vector<8xf32>
    %87 = vector.shape_cast %86 : vector<8xf32> to vector<8x1xf32>
    %cst_60 = arith.constant 1.280000e+02 : f32
    %88 = vector.broadcast %cst_60 : f32 to vector<8x1xf32>
    %89 = arith.divf %87, %88 : vector<8x1xf32>
    %90 = vector.broadcast %89 : vector<8x1xf32> to vector<8x128xf32>
    %91 = arith.subf %81, %90 : vector<8x128xf32>
    %92 = arith.mulf %91, %91 : vector<8x128xf32>
    %cst_61 = arith.constant dense<0.000000e+00> : vector<8xf32>
    %93 = vector.multi_reduction <add>, %92, %cst_61 [1] : vector<8x128xf32> to vector<8xf32>
    %94 = vector.shape_cast %93 : vector<8xf32> to vector<8x1xf32>
    %cst_62 = arith.constant 1.280000e+02 : f32
    %95 = vector.broadcast %cst_62 : f32 to vector<8x1xf32>
    %96 = arith.divf %94, %95 : vector<8x1xf32>
    %97 = vector.broadcast %89 : vector<8x1xf32> to vector<8x128xf32>
    %98 = arith.subf %81, %97 : vector<8x128xf32>
    %cst_63 = arith.constant 9.99999996E-13 : f32
    %99 = vector.broadcast %cst_63 : f32 to vector<8x1xf32>
    %100 = arith.addf %96, %99 : vector<8x1xf32>
    %101 = math.rsqrt %100 : vector<8x1xf32>
    %102 = vector.broadcast %101 : vector<8x1xf32> to vector<8x128xf32>
    %103 = arith.mulf %98, %102 : vector<8x128xf32>
    %104 = vector.broadcast %83 : vector<1x128xf32> to vector<8x128xf32>
    %105 = arith.mulf %103, %104 : vector<8x128xf32>
    %106 = vector.broadcast %85 : vector<1x128xf32> to vector<8x128xf32>
    %107 = arith.addf %105, %106 : vector<8x128xf32>
    %108 = arith.truncf %107 : vector<8x128xf32> to vector<8x128xbf16>
    %c0_64 = arith.constant 0 : index
    %c0_65 = arith.constant 0 : index
    %c0_66 = arith.constant 0 : index
    %109 = vector.load %arg18[%c0_64, %c0_65, %c0_66] : memref<1x128x256xbf16, #tpu.memory_space<vmem>>, vector<1x128x256xbf16>
    %110 = vector.shape_cast %109 : vector<1x128x256xbf16> to vector<128x256xbf16>
    %cst_67 = arith.constant dense<0.000000e+00> : vector<8x256xf32>
    %111 = tpu.matmul %108, %110, %cst_67 {dimension_numbers = #tpu.dot_dimension_numbers<[1], [0], [0], [1], [0, 0, 1, 1], [], []>} : vector<8x128xbf16>, vector<128x256xbf16>, vector<8x256xf32> -> vector<8x256xf32>
    %c0_68 = arith.constant 0 : index
    %c0_69 = arith.constant 0 : index
    %c0_70 = arith.constant 0 : index
    %112 = vector.load %arg19[%c0_68, %c0_69, %c0_70] : memref<1x1x256xf32, #tpu.memory_space<vmem>>, vector<1x1x256xf32>
    %113 = vector.shape_cast %112 : vector<1x1x256xf32> to vector<1x256xf32>
    %114 = vector.broadcast %113 : vector<1x256xf32> to vector<8x256xf32>
    %115 = arith.addf %111, %114 : vector<8x256xf32>
    %cst_71 = arith.constant 5.000000e-01 : f32
    %116 = vector.broadcast %cst_71 : f32 to vector<8x256xf32>
    %117 = arith.mulf %116, %115 : vector<8x256xf32>
    %cst_72 = arith.constant 4.471500e-02 : f32
    %118 = vector.broadcast %cst_72 : f32 to vector<8x256xf32>
    %119 = arith.mulf %118, %115 : vector<8x256xf32>
    %120 = arith.mulf %119, %115 : vector<8x256xf32>
    %121 = arith.mulf %120, %115 : vector<8x256xf32>
    %122 = arith.addf %115, %121 : vector<8x256xf32>
    %cst_73 = arith.constant 0.797884583 : f32
    %123 = vector.broadcast %cst_73 : f32 to vector<8x256xf32>
    %124 = arith.mulf %123, %122 : vector<8x256xf32>
    %125 = math.tanh %124 : vector<8x256xf32>
    %cst_74 = arith.constant 1.000000e+00 : f32
    %126 = vector.broadcast %cst_74 : f32 to vector<8x256xf32>
    %127 = arith.addf %126, %125 : vector<8x256xf32>
    %128 = arith.mulf %117, %127 : vector<8x256xf32>
    %129 = arith.truncf %128 : vector<8x256xf32> to vector<8x256xbf16>
    %c0_75 = arith.constant 0 : index
    %c0_76 = arith.constant 0 : index
    %c0_77 = arith.constant 0 : index
    %130 = vector.load %arg20[%c0_75, %c0_76, %c0_77] : memref<1x256x128xbf16, #tpu.memory_space<vmem>>, vector<1x256x128xbf16>
    %131 = vector.shape_cast %130 : vector<1x256x128xbf16> to vector<256x128xbf16>
    %cst_78 = arith.constant dense<0.000000e+00> : vector<8x128xf32>
    %132 = tpu.matmul %129, %131, %cst_78 {dimension_numbers = #tpu.dot_dimension_numbers<[1], [0], [0], [1], [0, 0, 1, 1], [], []>} : vector<8x256xbf16>, vector<256x128xbf16>, vector<8x128xf32> -> vector<8x128xf32>
    %c0_79 = arith.constant 0 : index
    %c0_80 = arith.constant 0 : index
    %c0_81 = arith.constant 0 : index
    %133 = vector.load %arg21[%c0_79, %c0_80, %c0_81] : memref<1x1x128xf32, #tpu.memory_space<vmem>>, vector<1x1x128xf32>
    %134 = vector.shape_cast %133 : vector<1x1x128xf32> to vector<1x128xf32>
    %135 = vector.broadcast %134 : vector<1x128xf32> to vector<8x128xf32>
    %136 = arith.addf %132, %135 : vector<8x128xf32>
    %137 = arith.addf %81, %136 : vector<8x128xf32>
    %c0_82 = arith.constant 0 : index
    %c0_83 = arith.constant 0 : index
    %138 = vector.load %arg25[%c0_82, %c0_83] : memref<8x128xf32, #tpu.memory_space<vmem>>, vector<8x128xf32>
    tpu.vector_store %arg25[%c0_82, %c0_83], %137 {strides = array<i32>} : memref<8x128xf32, #tpu.memory_space<vmem>>, vector<8x128xf32>,
    %c1_i32 = arith.constant 1 : i32
    %139 = arith.cmpi eq, %arg1, %c1_i32 : i32
    %140 = arith.extui %139 : i1 to i32
    %c0_i32_84 = arith.constant 0 : i32
    %141 = arith.cmpi ne, %140, %c0_i32_84 : i32
    scf.if %141 {
      %c0_85 = arith.constant 0 : index
      %c0_86 = arith.constant 0 : index
      %142 = vector.load %arg22[%c0_85, %c0_86] : memref<1x128xf32, #tpu.memory_space<vmem>>, vector<1x128xf32>
      %c0_87 = arith.constant 0 : index
      %c0_88 = arith.constant 0 : index
      %143 = vector.load %arg23[%c0_87, %c0_88] : memref<1x128xf32, #tpu.memory_space<vmem>>, vector<1x128xf32>
      %cst_89 = arith.constant dense<0.000000e+00> : vector<8xf32>
      %144 = vector.multi_reduction <add>, %137, %cst_89 [1] : vector<8x128xf32> to vector<8xf32>
      %145 = vector.shape_cast %144 : vector<8xf32> to vector<8x1xf32>
      %cst_90 = arith.constant 1.280000e+02 : f32
      %146 = vector.broadcast %cst_90 : f32 to vector<8x1xf32>
      %147 = arith.divf %145, %146 : vector<8x1xf32>
      %148 = vector.broadcast %147 : vector<8x1xf32> to vector<8x128xf32>
      %149 = arith.subf %137, %148 : vector<8x128xf32>
      %150 = arith.mulf %149, %149 : vector<8x128xf32>
      %cst_91 = arith.constant dense<0.000000e+00> : vector<8xf32>
      %151 = vector.multi_reduction <add>, %150, %cst_91 [1] : vector<8x128xf32> to vector<8xf32>
      %152 = vector.shape_cast %151 : vector<8xf32> to vector<8x1xf32>
      %cst_92 = arith.constant 1.280000e+02 : f32
      %153 = vector.broadcast %cst_92 : f32 to vector<8x1xf32>
      %154 = arith.divf %152, %153 : vector<8x1xf32>
      %155 = vector.broadcast %147 : vector<8x1xf32> to vector<8x128xf32>
      %156 = arith.subf %137, %155 : vector<8x128xf32>
      %cst_93 = arith.constant 9.99999996E-13 : f32
      %157 = vector.broadcast %cst_93 : f32 to vector<8x1xf32>
      %158 = arith.addf %154, %157 : vector<8x1xf32>
      %159 = math.rsqrt %158 : vector<8x1xf32>
      %160 = vector.broadcast %159 : vector<8x1xf32> to vector<8x128xf32>
      %161 = arith.mulf %156, %160 : vector<8x128xf32>
      %162 = vector.broadcast %142 : vector<1x128xf32> to vector<8x128xf32>
      %163 = arith.mulf %161, %162 : vector<8x128xf32>
      %164 = vector.broadcast %143 : vector<1x128xf32> to vector<8x128xf32>
      %165 = arith.addf %163, %164 : vector<8x128xf32>
      %c0_94 = arith.constant 0 : index
      %c0_95 = arith.constant 0 : index
      %c0_96 = arith.constant 0 : index
      %166 = vector.load %arg24[%c0_94, %c0_95, %c0_96] : memref<1x8x128xf32, #tpu.memory_space<vmem>>, vector<1x8x128xf32>
      %167 = vector.shape_cast %166 : vector<1x8x128xf32> to vector<8x128xf32>
      %168 = vector.shape_cast %165 : vector<8x128xf32> to vector<1x8x128xf32>
      tpu.vector_store %arg24[%c0_94, %c0_95, %c0_96], %168 {strides = array<i32>} : memref<1x8x128xf32, #tpu.memory_space<vmem>>, vector<1x8x128xf32>,
    } else {
    }
    return
  }
  func.func @transform_0(%arg0: i32, %arg1: i32) -> (i32, i32, i32) {
    %c0_i32 = arith.constant 0 : i32
    %c0_i32_0 = arith.constant 0 : i32
    %c0_i32_1 = arith.constant 0 : i32
    return %arg0, %c0_i32, %c0_i32_0 : i32, i32, i32
  }
  func.func @transform_1(%arg0: i32, %arg1: i32) -> (i32, i32) {
    %c0_i32 = arith.constant 0 : i32
    %c0_i32_0 = arith.constant 0 : i32
    %c0_i32_1 = arith.constant 0 : i32
    return %c0_i32, %c0_i32_0 : i32, i32
  }
  func.func @transform_2(%arg0: i32, %arg1: i32) -> (i32, i32) {
    %c0_i32 = arith.constant 0 : i32
    %c0_i32_0 = arith.constant 0 : i32
    %c0_i32_1 = arith.constant 0 : i32
    return %c0_i32, %c0_i32_0 : i32, i32
  }
  func.func @transform_3(%arg0: i32, %arg1: i32) -> (i32, i32) {
    %c0_i32 = arith.constant 0 : i32
    %c0_i32_0 = arith.constant 0 : i32
    %c0_i32_1 = arith.constant 0 : i32
    return %c0_i32, %c0_i32_0 : i32, i32
  }
  func.func @transform_4(%arg0: i32, %arg1: i32) -> (i32, i32, i32) {
    %c0_i32 = arith.constant 0 : i32
    %c0_i32_0 = arith.constant 0 : i32
    %c0_i32_1 = arith.constant 0 : i32
    return %arg1, %c0_i32, %c0_i32_0 : i32, i32, i32
  }
  func.func @transform_5(%arg0: i32, %arg1: i32) -> (i32, i32, i32) {
    %c0_i32 = arith.constant 0 : i32
    %c0_i32_0 = arith.constant 0 : i32
    %c0_i32_1 = arith.constant 0 : i32
    return %arg1, %c0_i32, %c0_i32_0 : i32, i32, i32
  }
  func.func @transform_6(%arg0: i32, %arg1: i32) -> (i32, i32, i32, i32) {
    %c0_i32 = arith.constant 0 : i32
    %c0_i32_0 = arith.constant 0 : i32
    %c0_i32_1 = arith.constant 0 : i32
    %c0_i32_2 = arith.constant 0 : i32
    return %arg1, %c0_i32, %c0_i32_0, %c0_i32_1 : i32, i32, i32, i32
  }
  func.func @transform_7(%arg0: i32, %arg1: i32) -> (i32, i32, i32, i32) {
    %c0_i32 = arith.constant 0 : i32
    %c0_i32_0 = arith.constant 0 : i32
    %c0_i32_1 = arith.constant 0 : i32
    %c0_i32_2 = arith.constant 0 : i32
    return %arg1, %c0_i32, %c0_i32_0, %c0_i32_1 : i32, i32, i32, i32
  }
  func.func @transform_8(%arg0: i32, %arg1: i32) -> (i32, i32, i32, i32) {
    %c0_i32 = arith.constant 0 : i32
    %c0_i32_0 = arith.constant 0 : i32
    %c0_i32_1 = arith.constant 0 : i32
    %c0_i32_2 = arith.constant 0 : i32
    return %arg1, %c0_i32, %c0_i32_0, %c0_i32_1 : i32, i32, i32, i32
  }
  func.func @transform_9(%arg0: i32, %arg1: i32) -> (i32, i32, i32, i32) {
    %c0_i32 = arith.constant 0 : i32
    %c0_i32_0 = arith.constant 0 : i32
    %c0_i32_1 = arith.constant 0 : i32
    %c0_i32_2 = arith.constant 0 : i32
    return %arg1, %c0_i32, %c0_i32_0, %c0_i32_1 : i32, i32, i32, i32
  }
  func.func @transform_10(%arg0: i32, %arg1: i32) -> (i32, i32, i32, i32) {
    %c0_i32 = arith.constant 0 : i32
    %c0_i32_0 = arith.constant 0 : i32
    %c0_i32_1 = arith.constant 0 : i32
    %c0_i32_2 = arith.constant 0 : i32
    return %arg1, %c0_i32, %c0_i32_0, %c0_i32_1 : i32, i32, i32, i32
  }
  func.func @transform_11(%arg0: i32, %arg1: i32) -> (i32, i32, i32, i32) {
    %c0_i32 = arith.constant 0 : i32
    %c0_i32_0 = arith.constant 0 : i32
    %c0_i32_1 = arith.constant 0 : i32
    %c0_i32_2 = arith.constant 0 : i32
    return %arg1, %c0_i32, %c0_i32_0, %c0_i32_1 : i32, i32, i32, i32
  }
  func.func @transform_12(%arg0: i32, %arg1: i32) -> (i32, i32, i32, i32) {
    %c0_i32 = arith.constant 0 : i32
    %c0_i32_0 = arith.constant 0 : i32
    %c0_i32_1 = arith.constant 0 : i32
    %c0_i32_2 = arith.constant 0 : i32
    return %arg1, %c0_i32, %c0_i32_0, %c0_i32_1 : i32, i32, i32, i32
  }
  func.func @transform_13(%arg0: i32, %arg1: i32) -> (i32, i32, i32) {
    %c0_i32 = arith.constant 0 : i32
    %c0_i32_0 = arith.constant 0 : i32
    %c0_i32_1 = arith.constant 0 : i32
    return %arg1, %c0_i32, %c0_i32_0 : i32, i32, i32
  }
  func.func @transform_14(%arg0: i32, %arg1: i32) -> (i32, i32, i32) {
    %c0_i32 = arith.constant 0 : i32
    %c0_i32_0 = arith.constant 0 : i32
    %c0_i32_1 = arith.constant 0 : i32
    return %arg1, %c0_i32, %c0_i32_0 : i32, i32, i32
  }
  func.func @transform_15(%arg0: i32, %arg1: i32) -> (i32, i32, i32) {
    %c0_i32 = arith.constant 0 : i32
    %c0_i32_0 = arith.constant 0 : i32
    %c0_i32_1 = arith.constant 0 : i32
    return %arg1, %c0_i32, %c0_i32_0 : i32, i32, i32
  }
  func.func @transform_16(%arg0: i32, %arg1: i32) -> (i32, i32, i32) {
    %c0_i32 = arith.constant 0 : i32
    %c0_i32_0 = arith.constant 0 : i32
    %c0_i32_1 = arith.constant 0 : i32
    return %arg1, %c0_i32, %c0_i32_0 : i32, i32, i32
  }
  func.func @transform_17(%arg0: i32, %arg1: i32) -> (i32, i32, i32) {
    %c0_i32 = arith.constant 0 : i32
    %c0_i32_0 = arith.constant 0 : i32
    %c0_i32_1 = arith.constant 0 : i32
    return %arg1, %c0_i32, %c0_i32_0 : i32, i32, i32
  }
  func.func @transform_18(%arg0: i32, %arg1: i32) -> (i32, i32, i32) {
    %c0_i32 = arith.constant 0 : i32
    %c0_i32_0 = arith.constant 0 : i32
    %c0_i32_1 = arith.constant 0 : i32
    return %arg1, %c0_i32, %c0_i32_0 : i32, i32, i32
  }
  func.func @transform_19(%arg0: i32, %arg1: i32) -> (i32, i32, i32) {
    %c0_i32 = arith.constant 0 : i32
    %c0_i32_0 = arith.constant 0 : i32
    %c0_i32_1 = arith.constant 0 : i32
    return %arg1, %c0_i32, %c0_i32_0 : i32, i32, i32
  }
  func.func @transform_20(%arg0: i32, %arg1: i32) -> (i32, i32) {
    %c0_i32 = arith.constant 0 : i32
    %c0_i32_0 = arith.constant 0 : i32
    %c0_i32_1 = arith.constant 0 : i32
    return %c0_i32, %c0_i32_0 : i32, i32
  }
  func.func @transform_21(%arg0: i32, %arg1: i32) -> (i32, i32) {
    %c0_i32 = arith.constant 0 : i32
    %c0_i32_0 = arith.constant 0 : i32
    %c0_i32_1 = arith.constant 0 : i32
    return %c0_i32, %c0_i32_0 : i32, i32
  }
  func.func @transform_22(%arg0: i32, %arg1: i32) -> (i32, i32, i32) {
    %c0_i32 = arith.constant 0 : i32
    %c0_i32_0 = arith.constant 0 : i32
    %c0_i32_1 = arith.constant 0 : i32
    return %arg0, %c0_i32, %c0_i32_0 : i32, i32, i32
  }
}

</mosaic_0001>

<llo_original>
// kernel: tpu_custom_call.1
$region0: #{tpu_custom_call.1}
  #allocation0 [shape = 'u32[]', space=smem, size = 0x4, offset = 0x4, fixed_abs, tag = 'smem constant byte address 0x4 - core index']
  #allocation1 [shape = 'u32[144,128]{1,0:T(1,128)}', space=vmem, size = 0x12000, scoped, tag = 'internal scratch']
  #allocation2 [shape = 'f32[8,128]{1,0:T(8,128)}', space=vmem, size = 0x1000, scoped, tag = 'scratch operand']
  %s0 = inlined_call_operand.vmem [shape: f32[2,8,64], index: 0, kind: input, shape index: {}]
  %s1 = inlined_call_operand.vmem [shape: f32[8,128], index: 1, kind: input, shape index: {}]
  %s2 = inlined_call_operand.vmem [shape: bf16[64,128], index: 2, kind: input, shape index: {}]
  %s3 = inlined_call_operand.vmem [shape: f32[1,128], index: 3, kind: input, shape index: {}]
  %s4 = inlined_call_operand.vmem [shape: f32[2,1,128], index: 4, kind: input, shape index: {}]
  %s5 = inlined_call_operand.vmem [shape: f32[2,1,128], index: 5, kind: input, shape index: {}]
  %s6 = inlined_call_operand.vmem [shape: bf16[2,2,128,64], index: 6, kind: input, shape index: {}]
  %s7 = inlined_call_operand.vmem [shape: f32[2,2,1,64], index: 7, kind: input, shape index: {}]
  %s8 = inlined_call_operand.vmem [shape: bf16[2,2,128,64], index: 8, kind: input, shape index: {}]
  %s9 = inlined_call_operand.vmem [shape: f32[2,2,1,64], index: 9, kind: input, shape index: {}]
  %s10 = inlined_call_operand.vmem [shape: bf16[2,2,128,64], index: 10, kind: input, shape index: {}]
  %s11 = inlined_call_operand.vmem [shape: f32[2,2,1,64], index: 11, kind: input, shape index: {}]
  %s12 = inlined_call_operand.vmem [shape: bf16[2,2,64,128], index: 12, kind: input, shape index: {}]
  %s13 = inlined_call_operand.vmem [shape: f32[2,1,128], index: 13, kind: input, shape index: {}]
  %s14 = inlined_call_operand.vmem [shape: f32[2,1,128], index: 14, kind: input, shape index: {}]
  %s15 = inlined_call_operand.vmem [shape: f32[2,1,128], index: 15, kind: input, shape index: {}]
  %s16 = inlined_call_operand.vmem [shape: bf16[2,128,256], index: 16, kind: input, shape index: {}]
  %s17 = inlined_call_operand.vmem [shape: f32[2,1,256], index: 17, kind: input, shape index: {}]
  %s18 = inlined_call_operand.vmem [shape: bf16[2,256,128], index: 18, kind: input, shape index: {}]
  %s19 = inlined_call_operand.vmem [shape: f32[2,1,128], index: 19, kind: input, shape index: {}]
  %s20 = inlined_call_operand.vmem [shape: f32[1,128], index: 20, kind: input, shape index: {}]
  %s21 = inlined_call_operand.vmem [shape: f32[1,128], index: 21, kind: input, shape index: {}]
  %s22 = inlined_call_operand.hbm [shape: f32[2,8,128], index: 22, kind: output, shape index: {}]
  %s23 = sld [smem:[#allocation0]]
  $region129: #{tpu_custom_call.1} parent=0
    _
  %s25 = ssub.s32 1, %s23
  %s26 = scalar_select 0, %s25, %s23
  $region1: #{tpu_custom_call.1} parent=0
    #allocation3 [shape = 'u8[8192]{0}', space=vmem, size = 0x2000, scoped, tag = 'output window, operand 0']
    #allocation4 [shape = 's32[2]{0}', space=sflag, size = 0x8, scoped, tag = 'scoped memory for tpu_custom_call.1']
    %27 = vsyncpa [#allocation4], 0
    %s28 = scalar_lea.sflag [#allocation4], 1
    %29 = vsyncpa %s28, 0
    loop: start=0, step=1, limit=6
    $region2: #{tpu_custom_call.1} parent=1 // loop_pre_header
      _
    $region3: #{tpu_custom_call.1} parent=1 // loop_header
      %s31 = sphi 0, %s35
      %p32 = scmp.ge.s32.totalorder %s31, 6
      %s38 = sphi 0, %s50
      %s39 = sphi 0, %s46
      %s40 = sphi 0, %s38
      %s41 = sphi 0, %s39
      %s42 = sphi 0, %s40
      %s43 = sphi 0, %s41
      %s53 = sphi 0, %s55
      %s56 = sphi 0, %s53
      %s57 = sphi 0, %s56
      %s73 = sphi 0, %s57
      %s77 = sphi 0, %s77
      %s79 = sphi 0, %s77
      %s80 = sphi 0, %s79
      %s94 = sphi 0, %s80
      %s98 = sphi 0, %s98
      %s100 = sphi 0, %s98
      %s101 = sphi 0, %s100
      %s115 = sphi 0, %s101
      %s119 = sphi 0, %s119
      %s121 = sphi 0, %s119
      %s122 = sphi 0, %s121
      %s136 = sphi 0, %s122
      %s142 = sphi 0, %s144
      %s145 = sphi 0, %s142
      %s146 = sphi 0, %s145
      %s162 = sphi 0, %s146
      %s168 = sphi 0, %s170
      %s171 = sphi 0, %s168
      %s172 = sphi 0, %s171
      %s188 = sphi 0, %s172
      %s194 = sphi 0, %s196
      %s197 = sphi 0, %s194
      %s198 = sphi 0, %s197
      %s214 = sphi 0, %s198
      %s220 = sphi 0, %s222
      %s223 = sphi 0, %s220
      %s224 = sphi 0, %s223
      %s240 = sphi 0, %s224
      %s246 = sphi 0, %s248
      %s249 = sphi 0, %s246
      %s250 = sphi 0, %s249
      %s266 = sphi 0, %s250
      %s272 = sphi 0, %s274
      %s275 = sphi 0, %s272
      %s276 = sphi 0, %s275
      %s292 = sphi 0, %s276
      %s298 = sphi 0, %s300
      %s301 = sphi 0, %s298
      %s302 = sphi 0, %s301
      %s318 = sphi 0, %s302
      %s324 = sphi 0, %s326
      %s327 = sphi 0, %s324
      %s328 = sphi 0, %s327
      %s344 = sphi 0, %s328
      %s350 = sphi 0, %s352
      %s353 = sphi 0, %s350
      %s354 = sphi 0, %s353
      %s370 = sphi 0, %s354
      %s376 = sphi 0, %s378
      %s379 = sphi 0, %s376
      %s380 = sphi 0, %s379
      %s396 = sphi 0, %s380
      %s402 = sphi 0, %s404
      %s405 = sphi 0, %s402
      %s406 = sphi 0, %s405
      %s422 = sphi 0, %s406
      %s428 = sphi 0, %s430
      %s431 = sphi 0, %s428
      %s432 = sphi 0, %s431
      %s448 = sphi 0, %s432
      %s454 = sphi 0, %s456
      %s457 = sphi 0, %s454
      %s458 = sphi 0, %s457
      %s474 = sphi 0, %s458
      %s480 = sphi 0, %s482
      %s483 = sphi 0, %s480
      %s484 = sphi 0, %s483
      %s500 = sphi 0, %s484
      %s506 = sphi 0, %s508
      %s509 = sphi 0, %s506
      %s510 = sphi 0, %s509
      %s526 = sphi 0, %s510
      %s532 = sphi 0, %s534
      %s535 = sphi 0, %s532
      %s536 = sphi 0, %s535
      %s552 = sphi 0, %s536
      %s556 = sphi 0, %s556
      %s558 = sphi 0, %s556
      %s559 = sphi 0, %s558
      %s573 = sphi 0, %s559
      %s577 = sphi 0, %s577
      %s579 = sphi 0, %s577
      %s580 = sphi 0, %s579
      %s594 = sphi 0, %s580
      %s600 = sphi 0, %s602
      %s603 = sphi 0, %s600
      %s604 = sphi 0, %s603
      %s620 = sphi 0, %s604
    $region4: #{tpu_custom_call.1} parent=1 // loop_header_branch
      %34 = sbr.rel (%p32) target = $region8
    $region5: #{tpu_custom_call.1} parent=1 // loop_body
      %s36 = ssub.s32 %s31, 1
      %s37 = ssub.s32 %s31, 2
      %s44 = sadd.s32 1, %s39
      %p45 = scmp.ge.s32.totalorder %s44, 2
      %s46 = scalar_select %p45, 0, %s44
      %s47 = sadd.s32 1, %s38
      %s48 = scalar_select %p45, %s47, %s38
      %p49 = scmp.ge.s32.totalorder %s48, 2
      %s50 = scalar_select %p49, 0, %s48
      %s51 = ssub.s32 %s38, %s50
      %p52 = scmp.eq.s32.totalorder %s51, 0
      %s54 = sadd.s32 %s53, 1
      %s55 = scalar_select %p52, %s53, %s54
      %p58 = pneg %p52
      %p59 = scmp.eq.s32.totalorder %s31, 3
      %p60 = por %p58, %p59
      %p61 = scmp.ne.s32.totalorder %s53, %s56
      %p62 = scmp.eq.s32.totalorder %s31, 0
      %p63 = por %p61, %p62
      %p64 = scmp.ne.s32.totalorder %s53, %s56
      %p65 = scmp.eq.s32.totalorder %s36, 3
      %p66 = por %p64, %p65
      %p67 = scmp.ne.s32.totalorder %s56, %s57
      %p68 = scmp.eq.s32.totalorder %s36, 0
      %p69 = por %p67, %p68
      %p70 = scmp.ne.s32.totalorder %s56, %s57
      %p71 = scmp.eq.s32.totalorder %s37, 3
      %p72 = por %p70, %p71
      %p74 = scmp.ne.s32.totalorder %s57, %s73
      %p75 = scmp.eq.s32.totalorder %s37, 0
      %p76 = por %p74, %p75
      %s78 = sadd.s32 %s77, 1
      %p81 = scmp.eq.s32.totalorder %s31, 3
      %p82 = scmp.ne.s32.totalorder %s77, %s79
      %p83 = scmp.eq.s32.totalorder %s31, 0
      %p84 = por %p82, %p83
      %p85 = scmp.ne.s32.totalorder %s77, %s79
      %p86 = scmp.eq.s32.totalorder %s36, 3
      %p87 = por %p85, %p86
      %p88 = scmp.ne.s32.totalorder %s79, %s80
      %p89 = scmp.eq.s32.totalorder %s36, 0
      %p90 = por %p88, %p89
      %p91 = scmp.ne.s32.totalorder %s79, %s80
      %p92 = scmp.eq.s32.totalorder %s37, 3
      %p93 = por %p91, %p92
      %p95 = scmp.ne.s32.totalorder %s80, %s94
      %p96 = scmp.eq.s32.totalorder %s37, 0
      %p97 = por %p95, %p96
      %s99 = sadd.s32 %s98, 1
      %p102 = scmp.eq.s32.totalorder %s31, 3
      %p103 = scmp.ne.s32.totalorder %s98, %s100
      %p104 = scmp.eq.s32.totalorder %s31, 0
      %p105 = por %p103, %p104
      %p106 = scmp.ne.s32.totalorder %s98, %s100
      %p107 = scmp.eq.s32.totalorder %s36, 3
      %p108 = por %p106, %p107
      %p109 = scmp.ne.s32.totalorder %s100, %s101
      %p110 = scmp.eq.s32.totalorder %s36, 0
      %p111 = por %p109, %p110
      %p112 = scmp.ne.s32.totalorder %s100, %s101
      %p113 = scmp.eq.s32.totalorder %s37, 3
      %p114 = por %p112, %p113
      %p116 = scmp.ne.s32.totalorder %s101, %s115
      %p117 = scmp.eq.s32.totalorder %s37, 0
      %p118 = por %p116, %p117
      %s120 = sadd.s32 %s119, 1
      %p123 = scmp.eq.s32.totalorder %s31, 3
      %p124 = scmp.ne.s32.totalorder %s119, %s121
      %p125 = scmp.eq.s32.totalorder %s31, 0
      %p126 = por %p124, %p125
      %p127 = scmp.ne.s32.totalorder %s119, %s121
      %p128 = scmp.eq.s32.totalorder %s36, 3
      %p129 = por %p127, %p128
      %p130 = scmp.ne.s32.totalorder %s121, %s122
      %p131 = scmp.eq.s32.totalorder %s36, 0
      %p132 = por %p130, %p131
      %p133 = scmp.ne.s32.totalorder %s121, %s122
      %p134 = scmp.eq.s32.totalorder %s37, 3
      %p135 = por %p133, %p134
      %p137 = scmp.ne.s32.totalorder %s122, %s136
      %p138 = scmp.eq.s32.totalorder %s37, 0
      %p139 = por %p137, %p138
      %s140 = ssub.s32 %s39, %s46
      %p141 = scmp.eq.s32.totalorder %s140, 0
      %s143 = sadd.s32 %s142, 1
      %s144 = scalar_select %p141, %s142, %s143
      %p147 = pneg %p141
      %p148 = scmp.eq.s32.totalorder %s31, 3
      %p149 = por %p147, %p148
      %p150 = scmp.ne.s32.totalorder %s142, %s145
      %p151 = scmp.eq.s32.totalorder %s31, 0
      %p152 = por %p150, %p151
      %p153 = scmp.ne.s32.totalorder %s142, %s145
      %p154 = scmp.eq.s32.totalorder %s36, 3
      %p155 = por %p153, %p154
      %p156 = scmp.ne.s32.totalorder %s145, %s146
      %p157 = scmp.eq.s32.totalorder %s36, 0
      %p158 = por %p156, %p157
      %p159 = scmp.ne.s32.totalorder %s145, %s146
      %p160 = scmp.eq.s32.totalorder %s37, 3
      %p161 = por %p159, %p160
      %p163 = scmp.ne.s32.totalorder %s146, %s162
      %p164 = scmp.eq.s32.totalorder %s37, 0
      %p165 = por %p163, %p164
      %s166 = ssub.s32 %s39, %s46
      %p167 = scmp.eq.s32.totalorder %s166, 0
      %s169 = sadd.s32 %s168, 1
      %s170 = scalar_select %p167, %s168, %s169
      %p173 = pneg %p167
      %p174 = scmp.eq.s32.totalorder %s31, 3
      %p175 = por %p173, %p174
      %p176 = scmp.ne.s32.totalorder %s168, %s171
      %p177 = scmp.eq.s32.totalorder %s31, 0
      %p178 = por %p176, %p177
      %p179 = scmp.ne.s32.totalorder %s168, %s171
      %p180 = scmp.eq.s32.totalorder %s36, 3
      %p181 = por %p179, %p180
      %p182 = scmp.ne.s32.totalorder %s171, %s172
      %p183 = scmp.eq.s32.totalorder %s36, 0
      %p184 = por %p182, %p183
      %p185 = scmp.ne.s32.totalorder %s171, %s172
      %p186 = scmp.eq.s32.totalorder %s37, 3
      %p187 = por %p185, %p186
      %p189 = scmp.ne.s32.totalorder %s172, %s188
      %p190 = scmp.eq.s32.totalorder %s37, 0
      %p191 = por %p189, %p190
      %s192 = ssub.s32 %s39, %s46
      %p193 = scmp.eq.s32.totalorder %s192, 0
      %s195 = sadd.s32 %s194, 1
      %s196 = scalar_select %p193, %s194, %s195
      %p199 = pneg %p193
      %p200 = scmp.eq.s32.totalorder %s31, 3
      %p201 = por %p199, %p200
      %p202 = scmp.ne.s32.totalorder %s194, %s197
      %p203 = scmp.eq.s32.totalorder %s31, 0
      %p204 = por %p202, %p203
      %p205 = scmp.ne.s32.totalorder %s194, %s197
      %p206 = scmp.eq.s32.totalorder %s36, 3
      %p207 = por %p205, %p206
      %p208 = scmp.ne.s32.totalorder %s197, %s198
      %p209 = scmp.eq.s32.totalorder %s36, 0
      %p210 = por %p208, %p209
      %p211 = scmp.ne.s32.totalorder %s197, %s198
      %p212 = scmp.eq.s32.totalorder %s37, 3
      %p213 = por %p211, %p212
      %p215 = scmp.ne.s32.totalorder %s198, %s214
      %p216 = scmp.eq.s32.totalorder %s37, 0
      %p217 = por %p215, %p216
      %s218 = ssub.s32 %s39, %s46
      %p219 = scmp.eq.s32.totalorder %s218, 0
      %s221 = sadd.s32 %s220, 1
      %s222 = scalar_select %p219, %s220, %s221
      %p225 = pneg %p219
      %p226 = scmp.eq.s32.totalorder %s31, 3
      %p227 = por %p225, %p226
      %p228 = scmp.ne.s32.totalorder %s220, %s223
      %p229 = scmp.eq.s32.totalorder %s31, 0
      %p230 = por %p228, %p229
      %p231 = scmp.ne.s32.totalorder %s220, %s223
      %p232 = scmp.eq.s32.totalorder %s36, 3
      %p233 = por %p231, %p232
      %p234 = scmp.ne.s32.totalorder %s223, %s224
      %p235 = scmp.eq.s32.totalorder %s36, 0
      %p236 = por %p234, %p235
      %p237 = scmp.ne.s32.totalorder %s223, %s224
      %p238 = scmp.eq.s32.totalorder %s37, 3
      %p239 = por %p237, %p238
      %p241 = scmp.ne.s32.totalorder %s224, %s240
      %p242 = scmp.eq.s32.totalorder %s37, 0
      %p243 = por %p241, %p242
      %s244 = ssub.s32 %s39, %s46
      %p245 = scmp.eq.s32.totalorder %s244, 0
      %s247 = sadd.s32 %s246, 1
      %s248 = scalar_select %p245, %s246, %s247
      %p251 = pneg %p245
      %p252 = scmp.eq.s32.totalorder %s31, 3
      %p253 = por %p251, %p252
      %p254 = scmp.ne.s32.totalorder %s246, %s249
      %p255 = scmp.eq.s32.totalorder %s31, 0
      %p256 = por %p254, %p255
      %p257 = scmp.ne.s32.totalorder %s246, %s249
      %p258 = scmp.eq.s32.totalorder %s36, 3
      %p259 = por %p257, %p258
      %p260 = scmp.ne.s32.totalorder %s249, %s250
      %p261 = scmp.eq.s32.totalorder %s36, 0
      %p262 = por %p260, %p261
      %p263 = scmp.ne.s32.totalorder %s249, %s250
      %p264 = scmp.eq.s32.totalorder %s37, 3
      %p265 = por %p263, %p264
      %p267 = scmp.ne.s32.totalorder %s250, %s266
      %p268 = scmp.eq.s32.totalorder %s37, 0
      %p269 = por %p267, %p268
      %s270 = ssub.s32 %s39, %s46
      %p271 = scmp.eq.s32.totalorder %s270, 0
      %s273 = sadd.s32 %s272, 1
      %s274 = scalar_select %p271, %s272, %s273
      %p277 = pneg %p271
      %p278 = scmp.eq.s32.totalorder %s31, 3
      %p279 = por %p277, %p278
      %p280 = scmp.ne.s32.totalorder %s272, %s275
      %p281 = scmp.eq.s32.totalorder %s31, 0
      %p282 = por %p280, %p281
      %p283 = scmp.ne.s32.totalorder %s272, %s275
      %p284 = scmp.eq.s32.totalorder %s36, 3
      %p285 = por %p283, %p284
      %p286 = scmp.ne.s32.totalorder %s275, %s276
      %p287 = scmp.eq.s32.totalorder %s36, 0
      %p288 = por %p286, %p287
      %p289 = scmp.ne.s32.totalorder %s275, %s276
      %p290 = scmp.eq.s32.totalorder %s37, 3
      %p291 = por %p289, %p290
      %p293 = scmp.ne.s32.totalorder %s276, %s292
      %p294 = scmp.eq.s32.totalorder %s37, 0
      %p295 = por %p293, %p294
      %s296 = ssub.s32 %s39, %s46
      %p297 = scmp.eq.s32.totalorder %s296, 0
      %s299 = sadd.s32 %s298, 1
      %s300 = scalar_select %p297, %s298, %s299
      %p303 = pneg %p297
      %p304 = scmp.eq.s32.totalorder %s31, 3
      %p305 = por %p303, %p304
      %p306 = scmp.ne.s32.totalorder %s298, %s301
      %p307 = scmp.eq.s32.totalorder %s31, 0
      %p308 = por %p306, %p307
      %p309 = scmp.ne.s32.totalorder %s298, %s301
      %p310 = scmp.eq.s32.totalorder %s36, 3
      %p311 = por %p309, %p310
      %p312 = scmp.ne.s32.totalorder %s301, %s302
      %p313 = scmp.eq.s32.totalorder %s36, 0
      %p314 = por %p312, %p313
      %p315 = scmp.ne.s32.totalorder %s301, %s302
      %p316 = scmp.eq.s32.totalorder %s37, 3
      %p317 = por %p315, %p316
      %p319 = scmp.ne.s32.totalorder %s302, %s318
      %p320 = scmp.eq.s32.totalorder %s37, 0
      %p321 = por %p319, %p320
      %s322 = ssub.s32 %s39, %s46
      %p323 = scmp.eq.s32.totalorder %s322, 0
      %s325 = sadd.s32 %s324, 1
      %s326 = scalar_select %p323, %s324, %s325
      %p329 = pneg %p323
      %p330 = scmp.eq.s32.totalorder %s31, 3
      %p331 = por %p329, %p330
      %p332 = scmp.ne.s32.totalorder %s324, %s327
      %p333 = scmp.eq.s32.totalorder %s31, 0
      %p334 = por %p332, %p333
      %p335 = scmp.ne.s32.totalorder %s324, %s327
      %p336 = scmp.eq.s32.totalorder %s36, 3
      %p337 = por %p335, %p336
      %p338 = scmp.ne.s32.totalorder %s327, %s328
      %p339 = scmp.eq.s32.totalorder %s36, 0
      %p340 = por %p338, %p339
      %p341 = scmp.ne.s32.totalorder %s327, %s328
      %p342 = scmp.eq.s32.totalorder %s37, 3
      %p343 = por %p341, %p342
      %p345 = scmp.ne.s32.totalorder %s328, %s344
      %p346 = scmp.eq.s32.totalorder %s37, 0
      %p347 = por %p345, %p346
      %s348 = ssub.s32 %s39, %s46
      %p349 = scmp.eq.s32.totalorder %s348, 0
      %s351 = sadd.s32 %s350, 1
      %s352 = scalar_select %p349, %s350, %s351
      %p355 = pneg %p349
      %p356 = scmp.eq.s32.totalorder %s31, 3
      %p357 = por %p355, %p356
      %p358 = scmp.ne.s32.totalorder %s350, %s353
      %p359 = scmp.eq.s32.totalorder %s31, 0
      %p360 = por %p358, %p359
      %p361 = scmp.ne.s32.totalorder %s350, %s353
      %p362 = scmp.eq.s32.totalorder %s36, 3
      %p363 = por %p361, %p362
      %p364 = scmp.ne.s32.totalorder %s353, %s354
      %p365 = scmp.eq.s32.totalorder %s36, 0
      %p366 = por %p364, %p365
      %p367 = scmp.ne.s32.totalorder %s353, %s354
      %p368 = scmp.eq.s32.totalorder %s37, 3
      %p369 = por %p367, %p368
      %p371 = scmp.ne.s32.totalorder %s354, %s370
      %p372 = scmp.eq.s32.totalorder %s37, 0
      %p373 = por %p371, %p372
      %s374 = ssub.s32 %s39, %s46
      %p375 = scmp.eq.s32.totalorder %s374, 0
      %s377 = sadd.s32 %s376, 1
      %s378 = scalar_select %p375, %s376, %s377
      %p381 = pneg %p375
      %p382 = scmp.eq.s32.totalorder %s31, 3
      %p383 = por %p381, %p382
      %p384 = scmp.ne.s32.totalorder %s376, %s379
      %p385 = scmp.eq.s32.totalorder %s31, 0
      %p386 = por %p384, %p385
      %p387 = scmp.ne.s32.totalorder %s376, %s379
      %p388 = scmp.eq.s32.totalorder %s36, 3
      %p389 = por %p387, %p388
      %p390 = scmp.ne.s32.totalorder %s379, %s380
      %p391 = scmp.eq.s32.totalorder %s36, 0
      %p392 = por %p390, %p391
      %p393 = scmp.ne.s32.totalorder %s379, %s380
      %p394 = scmp.eq.s32.totalorder %s37, 3
      %p395 = por %p393, %p394
      %p397 = scmp.ne.s32.totalorder %s380, %s396
      %p398 = scmp.eq.s32.totalorder %s37, 0
      %p399 = por %p397, %p398
      %s400 = ssub.s32 %s39, %s46
      %p401 = scmp.eq.s32.totalorder %s400, 0
      %s403 = sadd.s32 %s402, 1
      %s404 = scalar_select %p401, %s402, %s403
      %p407 = pneg %p401
      %p408 = scmp.eq.s32.totalorder %s31, 3
      %p409 = por %p407, %p408
      %p410 = scmp.ne.s32.totalorder %s402, %s405
      %p411 = scmp.eq.s32.totalorder %s31, 0
      %p412 = por %p410, %p411
      %p413 = scmp.ne.s32.totalorder %s402, %s405
      %p414 = scmp.eq.s32.totalorder %s36, 3
      %p415 = por %p413, %p414
      %p416 = scmp.ne.s32.totalorder %s405, %s406
      %p417 = scmp.eq.s32.totalorder %s36, 0
      %p418 = por %p416, %p417
      %p419 = scmp.ne.s32.totalorder %s405, %s406
      %p420 = scmp.eq.s32.totalorder %s37, 3
      %p421 = por %p419, %p420
      %p423 = scmp.ne.s32.totalorder %s406, %s422
      %p424 = scmp.eq.s32.totalorder %s37, 0
      %p425 = por %p423, %p424
      %s426 = ssub.s32 %s39, %s46
      %p427 = scmp.eq.s32.totalorder %s426, 0
      %s429 = sadd.s32 %s428, 1
      %s430 = scalar_select %p427, %s428, %s429
      %p433 = pneg %p427
      %p434 = scmp.eq.s32.totalorder %s31, 3
      %p435 = por %p433, %p434
      %p436 = scmp.ne.s32.totalorder %s428, %s431
      %p437 = scmp.eq.s32.totalorder %s31, 0
      %p438 = por %p436, %p437
      %p439 = scmp.ne.s32.totalorder %s428, %s431
      %p440 = scmp.eq.s32.totalorder %s36, 3
      %p441 = por %p439, %p440
      %p442 = scmp.ne.s32.totalorder %s431, %s432
      %p443 = scmp.eq.s32.totalorder %s36, 0
      %p444 = por %p442, %p443
      %p445 = scmp.ne.s32.totalorder %s431, %s432
      %p446 = scmp.eq.s32.totalorder %s37, 3
      %p447 = por %p445, %p446
      %p449 = scmp.ne.s32.totalorder %s432, %s448
      %p450 = scmp.eq.s32.totalorder %s37, 0
      %p451 = por %p449, %p450
      %s452 = ssub.s32 %s39, %s46
      %p453 = scmp.eq.s32.totalorder %s452, 0
      %s455 = sadd.s32 %s454, 1
      %s456 = scalar_select %p453, %s454, %s455
      %p459 = pneg %p453
      %p460 = scmp.eq.s32.totalorder %s31, 3
      %p461 = por %p459, %p460
      %p462 = scmp.ne.s32.totalorder %s454, %s457
      %p463 = scmp.eq.s32.totalorder %s31, 0
      %p464 = por %p462, %p463
      %p465 = scmp.ne.s32.totalorder %s454, %s457
      %p466 = scmp.eq.s32.totalorder %s36, 3
      %p467 = por %p465, %p466
      %p468 = scmp.ne.s32.totalorder %s457, %s458
      %p469 = scmp.eq.s32.totalorder %s36, 0
      %p470 = por %p468, %p469
      %p471 = scmp.ne.s32.totalorder %s457, %s458
      %p472 = scmp.eq.s32.totalorder %s37, 3
      %p473 = por %p471, %p472
      %p475 = scmp.ne.s32.totalorder %s458, %s474
      %p476 = scmp.eq.s32.totalorder %s37, 0
      %p477 = por %p475, %p476
      %s478 = ssub.s32 %s39, %s46
      %p479 = scmp.eq.s32.totalorder %s478, 0
      %s481 = sadd.s32 %s480, 1
      %s482 = scalar_select %p479, %s480, %s481
      %p485 = pneg %p479
      %p486 = scmp.eq.s32.totalorder %s31, 3
      %p487 = por %p485, %p486
      %p488 = scmp.ne.s32.totalorder %s480, %s483
      %p489 = scmp.eq.s32.totalorder %s31, 0
      %p490 = por %p488, %p489
      %p491 = scmp.ne.s32.totalorder %s480, %s483
      %p492 = scmp.eq.s32.totalorder %s36, 3
      %p493 = por %p491, %p492
      %p494 = scmp.ne.s32.totalorder %s483, %s484
      %p495 = scmp.eq.s32.totalorder %s36, 0
      %p496 = por %p494, %p495
      %p497 = scmp.ne.s32.totalorder %s483, %s484
      %p498 = scmp.eq.s32.totalorder %s37, 3
      %p499 = por %p497, %p498
      %p501 = scmp.ne.s32.totalorder %s484, %s500
      %p502 = scmp.eq.s32.totalorder %s37, 0
      %p503 = por %p501, %p502
      %s504 = ssub.s32 %s39, %s46
      %p505 = scmp.eq.s32.totalorder %s504, 0
      %s507 = sadd.s32 %s506, 1
      %s508 = scalar_select %p505, %s506, %s507
      %p511 = pneg %p505
      %p512 = scmp.eq.s32.totalorder %s31, 3
      %p513 = por %p511, %p512
      %p514 = scmp.ne.s32.totalorder %s506, %s509
      %p515 = scmp.eq.s32.totalorder %s31, 0
      %p516 = por %p514, %p515
      %p517 = scmp.ne.s32.totalorder %s506, %s509
      %p518 = scmp.eq.s32.totalorder %s36, 3
      %p519 = por %p517, %p518
      %p520 = scmp.ne.s32.totalorder %s509, %s510
      %p521 = scmp.eq.s32.totalorder %s36, 0
      %p522 = por %p520, %p521
      %p523 = scmp.ne.s32.totalorder %s509, %s510
      %p524 = scmp.eq.s32.totalorder %s37, 3
      %p525 = por %p523, %p524
      %p527 = scmp.ne.s32.totalorder %s510, %s526
      %p528 = scmp.eq.s32.totalorder %s37, 0
      %p529 = por %p527, %p528
      %s530 = ssub.s32 %s39, %s46
      %p531 = scmp.eq.s32.totalorder %s530, 0
      %s533 = sadd.s32 %s532, 1
      %s534 = scalar_select %p531, %s532, %s533
      %p537 = pneg %p531
      %p538 = scmp.eq.s32.totalorder %s31, 3
      %p539 = por %p537, %p538
      %p540 = scmp.ne.s32.totalorder %s532, %s535
      %p541 = scmp.eq.s32.totalorder %s31, 0
      %p542 = por %p540, %p541
      %p543 = scmp.ne.s32.totalorder %s532, %s535
      %p544 = scmp.eq.s32.totalorder %s36, 3
      %p545 = por %p543, %p544
      %p546 = scmp.ne.s32.totalorder %s535, %s536
      %p547 = scmp.eq.s32.totalorder %s36, 0
      %p548 = por %p546, %p547
      %p549 = scmp.ne.s32.totalorder %s535, %s536
      %p550 = scmp.eq.s32.totalorder %s37, 3
      %p551 = por %p549, %p550
      %p553 = scmp.ne.s32.totalorder %s536, %s552
      %p554 = scmp.eq.s32.totalorder %s37, 0
      %p555 = por %p553, %p554
      %s557 = sadd.s32 %s556, 1
      %p560 = scmp.eq.s32.totalorder %s31, 3
      %p561 = scmp.ne.s32.totalorder %s556, %s558
      %p562 = scmp.eq.s32.totalorder %s31, 0
      %p563 = por %p561, %p562
      %p564 = scmp.ne.s32.totalorder %s556, %s558
      %p565 = scmp.eq.s32.totalorder %s36, 3
      %p566 = por %p564, %p565
      %p567 = scmp.ne.s32.totalorder %s558, %s559
      %p568 = scmp.eq.s32.totalorder %s36, 0
      %p569 = por %p567, %p568
      %p570 = scmp.ne.s32.totalorder %s558, %s559
      %p571 = scmp.eq.s32.totalorder %s37, 3
      %p572 = por %p570, %p571
      %p574 = scmp.ne.s32.totalorder %s559, %s573
      %p575 = scmp.eq.s32.totalorder %s37, 0
      %p576 = por %p574, %p575
      %s578 = sadd.s32 %s577, 1
      %p581 = scmp.eq.s32.totalorder %s31, 3
      %p582 = scmp.ne.s32.totalorder %s577, %s579
      %p583 = scmp.eq.s32.totalorder %s31, 0
      %p584 = por %p582, %p583
      %p585 = scmp.ne.s32.totalorder %s577, %s579
      %p586 = scmp.eq.s32.totalorder %s36, 3
      %p587 = por %p585, %p586
      %p588 = scmp.ne.s32.totalorder %s579, %s580
      %p589 = scmp.eq.s32.totalorder %s36, 0
      %p590 = por %p588, %p589
      %p591 = scmp.ne.s32.totalorder %s579, %s580
      %p592 = scmp.eq.s32.totalorder %s37, 3
      %p593 = por %p591, %p592
      %p595 = scmp.ne.s32.totalorder %s580, %s594
      %p596 = scmp.eq.s32.totalorder %s37, 0
      %p597 = por %p595, %p596
      %s598 = ssub.s32 %s38, %s50
      %p599 = scmp.eq.s32.totalorder %s598, 0
      %s601 = sadd.s32 %s600, 1
      %s602 = scalar_select %p599, %s600, %s601
      %p605 = pneg %p599
      %p606 = scmp.eq.s32.totalorder %s31, 3
      %p607 = por %p605, %p606
      %p608 = scmp.ne.s32.totalorder %s600, %s603
      %p609 = scmp.eq.s32.totalorder %s31, 0
      %p610 = por %p608, %p609
      %p611 = scmp.ne.s32.totalorder %s600, %s603
      %p612 = scmp.eq.s32.totalorder %s36, 3
      %p613 = por %p611, %p612
      %p614 = scmp.ne.s32.totalorder %s603, %s604
      %p615 = scmp.eq.s32.totalorder %s36, 0
      %p616 = por %p614, %p615
      %p617 = scmp.ne.s32.totalorder %s603, %s604
      %p618 = scmp.eq.s32.totalorder %s37, 3
      %p619 = por %p617, %p618
      %p621 = scmp.ne.s32.totalorder %s604, %s620
      %p622 = scmp.eq.s32.totalorder %s37, 0
      %p623 = por %p621, %p622
      %p624 = scmp.le.s32.totalorder 1, %s31
      %p625 = scmp.lt.s32.totalorder %s31, 5
      %p626 = pnand %p624, %p625
      %p627 = pneg %p626
      // Predicated region
      $region9: #{tpu_custom_call.1} parent=5 // pred_check
        _
      $region10: #{tpu_custom_call.1} parent=5 // pred_check_branch
        %629 = sbr.rel (%p626) target = $region12
      $region11: #{tpu_custom_call.1} parent=5 // pred_region
        %s630 = ssub.s32 %s31, 1
        // Predicated region
        $region13: #{tpu_custom_call.1} parent=11 // pred_check
          %p631 = pneg %p90
        $region14: #{tpu_custom_call.1} parent=11 // pred_check_branch
          %633 = sbr.rel (%p631) target = $region16
        $region15: #{tpu_custom_call.1} parent=11 // pred_region
          _
        $region16: #{tpu_custom_call.1} parent=11 // pred_fallthru
          _
        // Predicated region
        $region17: #{tpu_custom_call.1} parent=11 // pred_check
          %p634 = pneg %p111
        $region18: #{tpu_custom_call.1} parent=11 // pred_check_branch
          %636 = sbr.rel (%p634) target = $region20
        $region19: #{tpu_custom_call.1} parent=11 // pred_region
          _
        $region20: #{tpu_custom_call.1} parent=11 // pred_fallthru
          _
        // Predicated region
        $region21: #{tpu_custom_call.1} parent=11 // pred_check
          %p637 = pneg %p132
        $region22: #{tpu_custom_call.1} parent=11 // pred_check_branch
          %639 = sbr.rel (%p637) target = $region24
        $region23: #{tpu_custom_call.1} parent=11 // pred_region
          _
        $region24: #{tpu_custom_call.1} parent=11 // pred_fallthru
          _
        // Predicated region
        $region25: #{tpu_custom_call.1} parent=11 // pred_check
          %p640 = pneg %p569
        $region26: #{tpu_custom_call.1} parent=11 // pred_check_branch
          %642 = sbr.rel (%p640) target = $region28
        $region27: #{tpu_custom_call.1} parent=11 // pred_region
          _
        $region28: #{tpu_custom_call.1} parent=11 // pred_fallthru
          _
        // Predicated region
        $region29: #{tpu_custom_call.1} parent=11 // pred_check
          %p643 = pneg %p590
        $region30: #{tpu_custom_call.1} parent=11 // pred_check_branch
          %645 = sbr.rel (%p643) target = $region32
        $region31: #{tpu_custom_call.1} parent=11 // pred_region
          _
        $region32: #{tpu_custom_call.1} parent=11 // pred_fallthru
          _
      $region12: #{tpu_custom_call.1} parent=5 // pred_fallthru
        _
      %p646 = scmp.lt.s32.totalorder %s31, 4
      // Predicated region
      $region33: #{tpu_custom_call.1} parent=5 // pred_check
        %p647 = pneg %p646
      $region34: #{tpu_custom_call.1} parent=5 // pred_check_branch
        %649 = sbr.rel (%p647) target = $region36
      $region35: #{tpu_custom_call.1} parent=5 // pred_region
        // Predicated region
        $region37: #{tpu_custom_call.1} parent=35 // pred_check
          %p650 = pneg %p63
        $region38: #{tpu_custom_call.1} parent=35 // pred_check_branch
          %652 = sbr.rel (%p650) target = $region40
        $region39: #{tpu_custom_call.1} parent=35 // pred_region
          %p653 = scmp.lt.s32.totalorder %s38, 1
          %s654 = scalar_select %p653, %s38, 1
          %s655 = smul.addr %s654, 8
          %s656 = scalar_lea.vmem %s0, %s655
        $region40: #{tpu_custom_call.1} parent=35 // pred_fallthru
          _
        // Predicated region
        $region41: #{tpu_custom_call.1} parent=35 // pred_check
          %p657 = pneg %p152
        $region42: #{tpu_custom_call.1} parent=35 // pred_check_branch
          %659 = sbr.rel (%p657) target = $region44
        $region43: #{tpu_custom_call.1} parent=35 // pred_region
          %p660 = scmp.lt.s32.totalorder %s39, 1
          %s661 = scalar_select %p660, %s39, 1
          %s662 = scalar_lea.vmem %s4, %s661
        $region44: #{tpu_custom_call.1} parent=35 // pred_fallthru
          _
        // Predicated region
        $region45: #{tpu_custom_call.1} parent=35 // pred_check
          %p663 = pneg %p178
        $region46: #{tpu_custom_call.1} parent=35 // pred_check_branch
          %665 = sbr.rel (%p663) target = $region48
        $region47: #{tpu_custom_call.1} parent=35 // pred_region
          %p666 = scmp.lt.s32.totalorder %s39, 1
          %s667 = scalar_select %p666, %s39, 1
          %s668 = scalar_lea.vmem %s5, %s667
        $region48: #{tpu_custom_call.1} parent=35 // pred_fallthru
          _
        // Predicated region
        $region49: #{tpu_custom_call.1} parent=35 // pred_check
          %p669 = pneg %p204
        $region50: #{tpu_custom_call.1} parent=35 // pred_check_branch
          %671 = sbr.rel (%p669) target = $region52
        $region51: #{tpu_custom_call.1} parent=35 // pred_region
          %p672 = scmp.lt.s32.totalorder %s39, 1
          %s673 = scalar_select %p672, %s39, 1
          %s674 = smul.addr %s673, 32
          %s675 = smul.addr %s674, 4
          %s676 = scalar_lea.vmem %s6, %s675
        $region52: #{tpu_custom_call.1} parent=35 // pred_fallthru
          _
        // Predicated region
        $region53: #{tpu_custom_call.1} parent=35 // pred_check
          %p677 = pneg %p230
        $region54: #{tpu_custom_call.1} parent=35 // pred_check_branch
          %679 = sbr.rel (%p677) target = $region56
        $region55: #{tpu_custom_call.1} parent=35 // pred_region
          %p680 = scmp.lt.s32.totalorder %s39, 1
          %s681 = scalar_select %p680, %s39, 1
          %s682 = smul.addr %s681, 2
          %s683 = scalar_lea.vmem %s7, %s682
        $region56: #{tpu_custom_call.1} parent=35 // pred_fallthru
          _
        // Predicated region
        $region57: #{tpu_custom_call.1} parent=35 // pred_check
          %p684 = pneg %p256
        $region58: #{tpu_custom_call.1} parent=35 // pred_check_branch
          %686 = sbr.rel (%p684) target = $region60
        $region59: #{tpu_custom_call.1} parent=35 // pred_region
          %p687 = scmp.lt.s32.totalorder %s39, 1
          %s688 = scalar_select %p687, %s39, 1
          %s689 = smul.addr %s688, 32
          %s690 = smul.addr %s689, 4
          %s691 = scalar_lea.vmem %s8, %s690
        $region60: #{tpu_custom_call.1} parent=35 // pred_fallthru
          _
        // Predicated region
        $region61: #{tpu_custom_call.1} parent=35 // pred_check
          %p692 = pneg %p282
        $region62: #{tpu_custom_call.1} parent=35 // pred_check_branch
          %694 = sbr.rel (%p692) target = $region64
        $region63: #{tpu_custom_call.1} parent=35 // pred_region
          %p695 = scmp.lt.s32.totalorder %s39, 1
          %s696 = scalar_select %p695, %s39, 1
          %s697 = smul.addr %s696, 2
          %s698 = scalar_lea.vmem %s9, %s697
        $region64: #{tpu_custom_call.1} parent=35 // pred_fallthru
          _
        // Predicated region
        $region65: #{tpu_custom_call.1} parent=35 // pred_check
          %p699 = pneg %p308
        $region66: #{tpu_custom_call.1} parent=35 // pred_check_branch
          %701 = sbr.rel (%p699) target = $region68
        $region67: #{tpu_custom_call.1} parent=35 // pred_region
          %p702 = scmp.lt.s32.totalorder %s39, 1
          %s703 = scalar_select %p702, %s39, 1
          %s704 = smul.addr %s703, 32
          %s705 = smul.addr %s704, 4
          %s706 = scalar_lea.vmem %s10, %s705
        $region68: #{tpu_custom_call.1} parent=35 // pred_fallthru
          _
        // Predicated region
        $region69: #{tpu_custom_call.1} parent=35 // pred_check
          %p707 = pneg %p334
        $region70: #{tpu_custom_call.1} parent=35 // pred_check_branch
          %709 = sbr.rel (%p707) target = $region72
        $region71: #{tpu_custom_call.1} parent=35 // pred_region
          %p710 = scmp.lt.s32.totalorder %s39, 1
          %s711 = scalar_select %p710, %s39, 1
          %s712 = smul.addr %s711, 2
          %s713 = scalar_lea.vmem %s11, %s712
        $region72: #{tpu_custom_call.1} parent=35 // pred_fallthru
          _
        // Predicated region
        $region73: #{tpu_custom_call.1} parent=35 // pred_check
          %p714 = pneg %p360
        $region74: #{tpu_custom_call.1} parent=35 // pred_check_branch
          %716 = sbr.rel (%p714) target = $region76
        $region75: #{tpu_custom_call.1} parent=35 // pred_region
          %p717 = scmp.lt.s32.totalorder %s39, 1
          %s718 = scalar_select %p717, %s39, 1
          %s719 = smul.addr %s718, 16
          %s720 = smul.addr %s719, 4
          %s721 = scalar_lea.vmem %s12, %s720
        $region76: #{tpu_custom_call.1} parent=35 // pred_fallthru
          _
        // Predicated region
        $region77: #{tpu_custom_call.1} parent=35 // pred_check
          %p722 = pneg %p386
        $region78: #{tpu_custom_call.1} parent=35 // pred_check_branch
          %724 = sbr.rel (%p722) target = $region80
        $region79: #{tpu_custom_call.1} parent=35 // pred_region
          %p725 = scmp.lt.s32.totalorder %s39, 1
          %s726 = scalar_select %p725, %s39, 1
          %s727 = scalar_lea.vmem %s13, %s726
        $region80: #{tpu_custom_call.1} parent=35 // pred_fallthru
          _
        // Predicated region
        $region81: #{tpu_custom_call.1} parent=35 // pred_check
          %p728 = pneg %p412
        $region82: #{tpu_custom_call.1} parent=35 // pred_check_branch
          %730 = sbr.rel (%p728) target = $region84
        $region83: #{tpu_custom_call.1} parent=35 // pred_region
          %p731 = scmp.lt.s32.totalorder %s39, 1
          %s732 = scalar_select %p731, %s39, 1
          %s733 = scalar_lea.vmem %s14, %s732
        $region84: #{tpu_custom_call.1} parent=35 // pred_fallthru
          _
        // Predicated region
        $region85: #{tpu_custom_call.1} parent=35 // pred_check
          %p734 = pneg %p438
        $region86: #{tpu_custom_call.1} parent=35 // pred_check_branch
          %736 = sbr.rel (%p734) target = $region88
        $region87: #{tpu_custom_call.1} parent=35 // pred_region
          %p737 = scmp.lt.s32.totalorder %s39, 1
          %s738 = scalar_select %p737, %s39, 1
          %s739 = scalar_lea.vmem %s15, %s738
        $region88: #{tpu_custom_call.1} parent=35 // pred_fallthru
          _
        // Predicated region
        $region89: #{tpu_custom_call.1} parent=35 // pred_check
          %p740 = pneg %p464
        $region90: #{tpu_custom_call.1} parent=35 // pred_check_branch
          %742 = sbr.rel (%p740) target = $region92
        $region91: #{tpu_custom_call.1} parent=35 // pred_region
          %p743 = scmp.lt.s32.totalorder %s39, 1
          %s744 = scalar_select %p743, %s39, 1
          %s745 = smul.addr %s744, 32
          %s746 = smul.addr %s745, 4
          %s747 = scalar_lea.vmem %s16, %s746
        $region92: #{tpu_custom_call.1} parent=35 // pred_fallthru
          _
        // Predicated region
        $region93: #{tpu_custom_call.1} parent=35 // pred_check
          %p748 = pneg %p490
        $region94: #{tpu_custom_call.1} parent=35 // pred_check_branch
          %750 = sbr.rel (%p748) target = $region96
        $region95: #{tpu_custom_call.1} parent=35 // pred_region
          %p751 = scmp.lt.s32.totalorder %s39, 1
          %s752 = scalar_select %p751, %s39, 1
          %s753 = smul.addr %s752, 2
          %s754 = scalar_lea.vmem %s17, %s753
        $region96: #{tpu_custom_call.1} parent=35 // pred_fallthru
          _
        // Predicated region
        $region97: #{tpu_custom_call.1} parent=35 // pred_check
          %p755 = pneg %p516
        $region98: #{tpu_custom_call.1} parent=35 // pred_check_branch
          %757 = sbr.rel (%p755) target = $region100
        $region99: #{tpu_custom_call.1} parent=35 // pred_region
          %p758 = scmp.lt.s32.totalorder %s39, 1
          %s759 = scalar_select %p758, %s39, 1
          %s760 = smul.addr %s759, 32
          %s761 = smul.addr %s760, 4
          %s762 = scalar_lea.vmem %s18, %s761
        $region100: #{tpu_custom_call.1} parent=35 // pred_fallthru
          _
        // Predicated region
        $region101: #{tpu_custom_call.1} parent=35 // pred_check
          %p763 = pneg %p542
        $region102: #{tpu_custom_call.1} parent=35 // pred_check_branch
          %765 = sbr.rel (%p763) target = $region104
        $region103: #{tpu_custom_call.1} parent=35 // pred_region
          %p766 = scmp.lt.s32.totalorder %s39, 1
          %s767 = scalar_select %p766, %s39, 1
          %s768 = scalar_lea.vmem %s19, %s767
        $region104: #{tpu_custom_call.1} parent=35 // pred_fallthru
          _
      $region36: #{tpu_custom_call.1} parent=5 // pred_fallthru
        _
      %p769 = scmp.le.s32.totalorder 1, %s31
      %p770 = scmp.lt.s32.totalorder %s31, 5
      %p771 = pnand %p769, %p770
      %p772 = pneg %p771
      // Predicated region
      $region105: #{tpu_custom_call.1} parent=5 // pred_check
        _
      $region106: #{tpu_custom_call.1} parent=5 // pred_check_branch
        %774 = sbr.rel (%p771) target = $region108
      $region107: #{tpu_custom_call.1} parent=5 // pred_region
        %s775 = ssub.s32 %s31, 1
        %p776 = scmp.lt.s32.totalorder %s40, 1
        %s777 = scalar_select %p776, %s40, 1
        %s778 = smul.addr %s777, 8
        %s779 = scalar_lea.vmem %s0, %s778
        %p780 = pneg %p69
        %p781 = pneg %p66
        %p782 = pneg %p90
        %p783 = pneg %p87
        %p784 = pneg %p111
        %p785 = pneg %p108
        %p786 = pneg %p132
        %p787 = pneg %p129
        %p788 = scmp.lt.s32.totalorder %s41, 1
        %s789 = scalar_select %p788, %s41, 1
        %s790 = scalar_lea.vmem %s4, %s789
        %p791 = pneg %p158
        %p792 = pneg %p155
        %p793 = scmp.lt.s32.totalorder %s41, 1
        %s794 = scalar_select %p793, %s41, 1
        %s795 = scalar_lea.vmem %s5, %s794
        %p796 = pneg %p184
        %p797 = pneg %p181
        %p798 = scmp.lt.s32.totalorder %s41, 1
        %s799 = scalar_select %p798, %s41, 1
        %s800 = smul.addr %s799, 32
        %s801 = smul.addr %s800, 4
        %s802 = scalar_lea.vmem %s6, %s801
        %p803 = pneg %p210
        %p804 = pneg %p207
        %p805 = scmp.lt.s32.totalorder %s41, 1
        %s806 = scalar_select %p805, %s41, 1
        %s807 = smul.addr %s806, 2
        %s808 = scalar_lea.vmem %s7, %s807
        %p809 = pneg %p236
        %p810 = pneg %p233
        %p811 = scmp.lt.s32.totalorder %s41, 1
        %s812 = scalar_select %p811, %s41, 1
        %s813 = smul.addr %s812, 32
        %s814 = smul.addr %s813, 4
        %s815 = scalar_lea.vmem %s8, %s814
        %p816 = pneg %p262
        %p817 = pneg %p259
        %p818 = scmp.lt.s32.totalorder %s41, 1
        %s819 = scalar_select %p818, %s41, 1
        %s820 = smul.addr %s819, 2
        %s821 = scalar_lea.vmem %s9, %s820
        %p822 = pneg %p288
        %p823 = pneg %p285
        %p824 = scmp.lt.s32.totalorder %s41, 1
        %s825 = scalar_select %p824, %s41, 1
        %s826 = smul.addr %s825, 32
        %s827 = smul.addr %s826, 4
        %s828 = scalar_lea.vmem %s10, %s827
        %p829 = pneg %p314
        %p830 = pneg %p311
        %p831 = scmp.lt.s32.totalorder %s41, 1
        %s832 = scalar_select %p831, %s41, 1
        %s833 = smul.addr %s832, 2
        %s834 = scalar_lea.vmem %s11, %s833
        %p835 = pneg %p340
        %p836 = pneg %p337
        %p837 = scmp.lt.s32.totalorder %s41, 1
        %s838 = scalar_select %p837, %s41, 1
        %s839 = smul.addr %s838, 16
        %s840 = smul.addr %s839, 4
        %s841 = scalar_lea.vmem %s12, %s840
        %p842 = pneg %p366
        %p843 = pneg %p363
        %p844 = scmp.lt.s32.totalorder %s41, 1
        %s845 = scalar_select %p844, %s41, 1
        %s846 = scalar_lea.vmem %s13, %s845
        %p847 = pneg %p392
        %p848 = pneg %p389
        %p849 = scmp.lt.s32.totalorder %s41, 1
        %s850 = scalar_select %p849, %s41, 1
        %s851 = scalar_lea.vmem %s14, %s850
        %p852 = pneg %p418
        %p853 = pneg %p415
        %p854 = scmp.lt.s32.totalorder %s41, 1
        %s855 = scalar_select %p854, %s41, 1
        %s856 = scalar_lea.vmem %s15, %s855
        %p857 = pneg %p444
        %p858 = pneg %p441
        %p859 = scmp.lt.s32.totalorder %s41, 1
        %s860 = scalar_select %p859, %s41, 1
        %s861 = smul.addr %s860, 32
        %s862 = smul.addr %s861, 4
        %s863 = scalar_lea.vmem %s16, %s862
        %p864 = pneg %p470
        %p865 = pneg %p467
        %p866 = scmp.lt.s32.totalorder %s41, 1
        %s867 = scalar_select %p866, %s41, 1
        %s868 = smul.addr %s867, 2
        %s869 = scalar_lea.vmem %s17, %s868
        %p870 = pneg %p496
        %p871 = pneg %p493
        %p872 = scmp.lt.s32.totalorder %s41, 1
        %s873 = scalar_select %p872, %s41, 1
        %s874 = smul.addr %s873, 32
        %s875 = smul.addr %s874, 4
        %s876 = scalar_lea.vmem %s18, %s875
        %p877 = pneg %p522
        %p878 = pneg %p519
        %p879 = scmp.lt.s32.totalorder %s41, 1
        %s880 = scalar_select %p879, %s41, 1
        %s881 = scalar_lea.vmem %s19, %s880
        %p882 = pneg %p548
        %p883 = pneg %p545
        %p884 = pneg %p569
        %p885 = pneg %p566
        %p886 = pneg %p590
        %p887 = pneg %p587
        %p888 = pneg %p616
        %p889 = pneg %p613
        %s890 = sand.u32 %s603, 1
        %s891 = scalar_lea.sflag [#allocation4], %s890
        %s892 = sand.u32 %s603, 1
        %s893 = smul.addr %s892, 8
        %s894 = scalar_lea.vmem [#allocation3], %s893
        %p895 = scmp.lt.s32.totalorder %s40, 1
        %s896 = scalar_select %p895, %s40, 1
        %s897 = smul.addr %s896, 8
        %s898 = scalar_lea.vmem %s0, %s897
        %p899 = scmp.lt.s32.totalorder %s41, 1
        %s900 = scalar_select %p899, %s41, 1
        %s901 = scalar_lea.vmem %s4, %s900
        %p902 = scmp.lt.s32.totalorder %s41, 1
        %s903 = scalar_select %p902, %s41, 1
        %s904 = scalar_lea.vmem %s5, %s903
        %p905 = scmp.lt.s32.totalorder %s41, 1
        %s906 = scalar_select %p905, %s41, 1
        %s907 = smul.addr %s906, 32
        %s908 = smul.addr %s907, 4
        %s909 = scalar_lea.vmem %s6, %s908
        %p910 = scmp.lt.s32.totalorder %s41, 1
        %s911 = scalar_select %p910, %s41, 1
        %s912 = smul.addr %s911, 2
        %s913 = scalar_lea.vmem %s7, %s912
        %p914 = scmp.lt.s32.totalorder %s41, 1
        %s915 = scalar_select %p914, %s41, 1
        %s916 = smul.addr %s915, 32
        %s917 = smul.addr %s916, 4
        %s918 = scalar_lea.vmem %s8, %s917
        %p919 = scmp.lt.s32.totalorder %s41, 1
        %s920 = scalar_select %p919, %s41, 1
        %s921 = smul.addr %s920, 2
        %s922 = scalar_lea.vmem %s9, %s921
        %p923 = scmp.lt.s32.totalorder %s41, 1
        %s924 = scalar_select %p923, %s41, 1
        %s925 = smul.addr %s924, 32
        %s926 = smul.addr %s925, 4
        %s927 = scalar_lea.vmem %s10, %s926
        %p928 = scmp.lt.s32.totalorder %s41, 1
        %s929 = scalar_select %p928, %s41, 1
        %s930 = smul.addr %s929, 2
        %s931 = scalar_lea.vmem %s11, %s930
        %p932 = scmp.lt.s32.totalorder %s41, 1
        %s933 = scalar_select %p932, %s41, 1
        %s934 = smul.addr %s933, 16
        %s935 = smul.addr %s934, 4
        %s936 = scalar_lea.vmem %s12, %s935
        %p937 = scmp.lt.s32.totalorder %s41, 1
        %s938 = scalar_select %p937, %s41, 1
        %s939 = scalar_lea.vmem %s13, %s938
        %p940 = scmp.lt.s32.totalorder %s41, 1
        %s941 = scalar_select %p940, %s41, 1
        %s942 = scalar_lea.vmem %s14, %s941
        %p943 = scmp.lt.s32.totalorder %s41, 1
        %s944 = scalar_select %p943, %s41, 1
        %s945 = scalar_lea.vmem %s15, %s944
        %p946 = scmp.lt.s32.totalorder %s41, 1
        %s947 = scalar_select %p946, %s41, 1
        %s948 = smul.addr %s947, 32
        %s949 = smul.addr %s948, 4
        %s950 = scalar_lea.vmem %s16, %s949
        %p951 = scmp.lt.s32.totalorder %s41, 1
        %s952 = scalar_select %p951, %s41, 1
        %s953 = smul.addr %s952, 2
        %s954 = scalar_lea.vmem %s17, %s953
        %p955 = scmp.lt.s32.totalorder %s41, 1
        %s956 = scalar_select %p955, %s41, 1
        %s957 = smul.addr %s956, 32
        %s958 = smul.addr %s957, 4
        %s959 = scalar_lea.vmem %s18, %s958
        %p960 = scmp.lt.s32.totalorder %s41, 1
        %s961 = scalar_select %p960, %s41, 1
        %s962 = scalar_lea.vmem %s19, %s961
        %p964 = scmp.eq.s32.totalorder %s41, 0
        // Predicated region
        $region109: #{tpu_custom_call.1} parent=107 // pred_check
          %p965 = pneg %p964
        $region110: #{tpu_custom_call.1} parent=107 // pred_check_branch
          %967 = sbr.rel (%p965) target = $region112
        $region111: #{tpu_custom_call.1} parent=107 // pred_region
          %v968 = vld [vmem:[%s898] sm:$0xff]
          %v969 = vpack.c.bf16 %v968, %v968
          %v970 = vld [vmem:[%s2] sm:$0xf]
          %v971 = vld [vmem:[%s2 + $0x4] sm:$0xf]
          %v972 = vld [vmem:[%s2 + $0x8] sm:$0xf]
          %v973 = vld [vmem:[%s2 + $0xc] sm:$0xf]
          %v974 = vld [vmem:[%s2 + $0x10] sm:$0xf]
          %v975 = vld [vmem:[%s2 + $0x14] sm:$0xf]
          %v976 = vld [vmem:[%s2 + $0x18] sm:$0xf]
          %v977 = vld [vmem:[%s2 + $0x1c] sm:$0xf]
          %v978 = vld [vmem:[%s3] sm:$0x1]
          %v980 = vlaneseq
          %v981 = vshrl.u32 %v980, 7
          %v982 = vsub.s32 0, %v981
          %v983 = vrot.slane %v978, %v982
          %v993 = vunpack.c.l.b16 %v970
          %v994 = vunpack.c.l.b16 %v971
          %v995 = vunpack.c.l.b16 %v972
          %v996 = vunpack.c.l.b16 %v973
          %v997 = vunpack.c.l.b16 %v974
          %v998 = vunpack.c.l.b16 %v975
          %v999 = vunpack.c.l.b16 %v976
          %v1000 = vunpack.c.l.b16 %v977
          %v1001 = vpack.c.b16 %v994, %v993
          %v1002 = vpack.c.b16 %v996, %v995
          %v1003 = vpack.c.b16 %v998, %v997
          %v1004 = vpack.c.b16 %v1000, %v999
          %vm1009 = vcmask 523264
          %v1011 = vsel %vm1009, %v969, 0
          %1013 = vmatprep.subr.bf16.mxu0 0
          %1014 = vmatpush1.bf16.msra.mxu0 %v1001
          %1015 = vmatprep.subr.bf16.mxu0 0
          %1016 = vmatpush1.bf16.msra.mxu0 %v1002
          %1017 = vmatprep.subr.bf16.mxu0 0
          %1018 = vmatpush1.bf16.msra.mxu0 %v1003
          %1019 = vmatprep.subr.bf16.mxu0 0
          %1020 = vmatpush1.bf16.msra.mxu0 %v1004
          %1021 = vmatprep.subr.bf16.mxu0 0
          %1022 = vmatpush1.bf16.msra.mxu0 0
          %1023 = vmatprep.subr.bf16.mxu0 0
          %1024 = vmatpush1.bf16.msra.mxu0 0
          %1025 = vmatprep.subr.bf16.mxu0 0
          %1026 = vmatpush1.bf16.msra.mxu0 0
          %1027 = vmatprep.subr.bf16.mxu0 0
          %1028 = vmatpush1.bf16.msra.mxu0 0
          %1029 = vmatprep.subr.bf16.mxu0 0
          %1030 = vmatpush1.bf16.msra.mxu0 0
          %1031 = vmatprep.subr.bf16.mxu0 0
          %1032 = vmatpush1.bf16.msra.mxu0 0
          %1033 = vmatprep.subr.bf16.mxu0 0
          %1034 = vmatpush1.bf16.msra.mxu0 0
          %1035 = vmatprep.subr.bf16.mxu0 0
          %1036 = vmatpush1.bf16.msra.mxu0 0
          %1037 = vmatprep.subr.bf16.mxu0 0
          %1038 = vmatpush1.bf16.msra.mxu0 0
          %1039 = vmatprep.subr.bf16.mxu0 0
          %1040 = vmatpush1.bf16.msra.mxu0 0
          %1041 = vmatprep.subr.bf16.mxu0 0
          %1042 = vmatpush1.bf16.msra.mxu0 0
          %1043 = vmatprep.subr.bf16.mxu0 0
          %1044 = vmatpush1.bf16.msra.mxu0 0
          %1045 = vmatprep.mubr.bf16.mxu0 0
          %1046 = vmatmul.mubr.bf16.gmra.mrb[0].mxu0 %v1011
          %v1047 = vpop.f32.mrb[0].mxu0
          %v1048 = vadd.f32 %v983, %v1047
          %v1049 = vpop.f32.mrb[0].mxu0
          %v1050 = vpop.f32.mrb[0].mxu0
          %v1051 = vpop.f32.mrb[0].mxu0
          %1052 = vdwg.mxu0
          %v1053 = vld [vmem:[%s1] sm:$0xff]
          %v1054 = vadd.f32 %v1048, %v1053
          %1055 = vst [vmem:[#allocation2] sm:$0xff] %v1054
        $region112: #{tpu_custom_call.1} parent=107 // pred_fallthru
          _
        %v1056 = vld [vmem:[#allocation2] sm:$0xff]
        %v1057 = vld [vmem:[%s901] sm:$0x1]
        %v1058 = vld [vmem:[%s904] sm:$0x1]
        %1059 = vadd.xlane.f32.xlu0 %v1056
        %v1060 = vpop.xlane.xlu0 %1059
        %v1061 = vrcp.pop 128.0
        %v1062 = vmul.f32 %v1060, %v1061
        %v1063 = vsub.f32 %v1056, %v1062
        %v1064 = vmul.f32 %v1063, %v1063
        %1065 = vadd.xlane.f32.xlu0 %v1064
        %v1066 = vpop.xlane.xlu0 %1065
        %v1067 = vmul.f32 %v1066, %v1061
        %v1068 = vadd.f32 %v1067, 1e-12
        %v1069 = vrsqrt.pop %v1068
        %v1070 = vmul.f32 %v1063, %v1069
        %v1072 = vlaneseq
        %v1073 = vshrl.u32 %v1072, 7
        %v1074 = vsub.s32 0, %v1073
        %v1075 = vrot.slane %v1057, %v1074
        %v1077 = vmul.f32 %v1070, %v1075
        %v1079 = vlaneseq
        %v1080 = vshrl.u32 %v1079, 7
        %v1081 = vsub.s32 0, %v1080
        %v1082 = vrot.slane %v1058, %v1081
        %v1084 = vadd.f32 %v1077, %v1082
        %v1085 = vpack.c.bf16 %v1084, %v1084
        %v1086 = vld [vmem:[%s909] sm:$0xf]
        %v1087 = vld [vmem:[%s909 + $0x4] sm:$0xf]
        %v1088 = vld [vmem:[%s909 + $0x8] sm:$0xf]
        %v1089 = vld [vmem:[%s909 + $0xc] sm:$0xf]
        %v1090 = vld [vmem:[%s909 + $0x10] sm:$0xf]
        %v1091 = vld [vmem:[%s909 + $0x14] sm:$0xf]
        %v1092 = vld [vmem:[%s909 + $0x18] sm:$0xf]
        %v1093 = vld [vmem:[%s909 + $0x1c] sm:$0xf]
        %v1094 = vld [vmem:[%s909 + $0x20] sm:$0xf]
        %v1095 = vld [vmem:[%s909 + $0x24] sm:$0xf]
        %v1096 = vld [vmem:[%s909 + $0x28] sm:$0xf]
        %v1097 = vld [vmem:[%s909 + $0x2c] sm:$0xf]
        %v1098 = vld [vmem:[%s909 + $0x30] sm:$0xf]
        %v1099 = vld [vmem:[%s909 + $0x34] sm:$0xf]
        %v1100 = vld [vmem:[%s909 + $0x38] sm:$0xf]
        %v1101 = vld [vmem:[%s909 + $0x3c] sm:$0xf]
        %v1102 = vld [vmem:[%s909 + $0x40] sm:$0xf]
        %v1103 = vld [vmem:[%s909 + $0x44] sm:$0xf]
        %v1104 = vld [vmem:[%s909 + $0x48] sm:$0xf]
        %v1105 = vld [vmem:[%s909 + $0x4c] sm:$0xf]
        %v1106 = vld [vmem:[%s909 + $0x50] sm:$0xf]
        %v1107 = vld [vmem:[%s909 + $0x54] sm:$0xf]
        %v1108 = vld [vmem:[%s909 + $0x58] sm:$0xf]
        %v1109 = vld [vmem:[%s909 + $0x5c] sm:$0xf]
        %v1110 = vld [vmem:[%s909 + $0x60] sm:$0xf]
        %v1111 = vld [vmem:[%s909 + $0x64] sm:$0xf]
        %v1112 = vld [vmem:[%s909 + $0x68] sm:$0xf]
        %v1113 = vld [vmem:[%s909 + $0x6c] sm:$0xf]
        %v1114 = vld [vmem:[%s909 + $0x70] sm:$0xf]
        %v1115 = vld [vmem:[%s909 + $0x74] sm:$0xf]
        %v1116 = vld [vmem:[%s909 + $0x78] sm:$0xf]
        %v1117 = vld [vmem:[%s909 + $0x7c] sm:$0xf]
        %v1118 = vld [vmem:[%s913] sm:$0x1]
        %v1119 = vld [vmem:[%s913 + $0x1] sm:$0x1]
        %v1122 = vlaneseq
        %v1123 = vshrl.u32 %v1122, 7
        %v1124 = vsub.s32 0, %v1123
        %v1125 = vrot.slane %v1118, %v1124
        %v1126 = vlaneseq
        %v1127 = vshrl.u32 %v1126, 7
        %v1128 = vsub.s32 0, %v1127
        %v1129 = vrot.slane %v1119, %v1128
        %v1148 = vunpack.c.l.b16 %v1086
        %v1149 = vunpack.c.l.b16 %v1087
        %v1150 = vunpack.c.l.b16 %v1088
        %v1151 = vunpack.c.l.b16 %v1089
        %v1152 = vunpack.c.l.b16 %v1090
        %v1153 = vunpack.c.l.b16 %v1091
        %v1154 = vunpack.c.l.b16 %v1092
        %v1155 = vunpack.c.l.b16 %v1093
        %v1156 = vunpack.c.l.b16 %v1094
        %v1157 = vunpack.c.l.b16 %v1095
        %v1158 = vunpack.c.l.b16 %v1096
        %v1159 = vunpack.c.l.b16 %v1097
        %v1160 = vunpack.c.l.b16 %v1098
        %v1161 = vunpack.c.l.b16 %v1099
        %v1162 = vunpack.c.l.b16 %v1100
        %v1163 = vunpack.c.l.b16 %v1101
        %v1164 = vpack.c.b16 %v1149, %v1148
        %v1165 = vpack.c.b16 %v1151, %v1150
        %v1166 = vpack.c.b16 %v1153, %v1152
        %v1167 = vpack.c.b16 %v1155, %v1154
        %v1168 = vpack.c.b16 %v1157, %v1156
        %v1169 = vpack.c.b16 %v1159, %v1158
        %v1170 = vpack.c.b16 %v1161, %v1160
        %v1171 = vpack.c.b16 %v1163, %v1162
        %1180 = vmatprep.subr.bf16.mxu0 0
        %1181 = vmatpush1.bf16.msra.mxu0 %v1164
        %1182 = vmatprep.subr.bf16.mxu0 0
        %1183 = vmatpush1.bf16.msra.mxu0 %v1165
        %1184 = vmatprep.subr.bf16.mxu0 0
        %1185 = vmatpush1.bf16.msra.mxu0 %v1166
        %1186 = vmatprep.subr.bf16.mxu0 0
        %1187 = vmatpush1.bf16.msra.mxu0 %v1167
        %1188 = vmatprep.subr.bf16.mxu0 0
        %1189 = vmatpush1.bf16.msra.mxu0 %v1168
        %1190 = vmatprep.subr.bf16.mxu0 0
        %1191 = vmatpush1.bf16.msra.mxu0 %v1169
        %1192 = vmatprep.subr.bf16.mxu0 0
        %1193 = vmatpush1.bf16.msra.mxu0 %v1170
        %1194 = vmatprep.subr.bf16.mxu0 0
        %1195 = vmatpush1.bf16.msra.mxu0 %v1171
        %1196 = vmatprep.subr.bf16.mxu0 0
        %1197 = vmatpush1.bf16.msra.mxu0 0
        %1198 = vmatprep.subr.bf16.mxu0 0
        %1199 = vmatpush1.bf16.msra.mxu0 0
        %1200 = vmatprep.subr.bf16.mxu0 0
        %1201 = vmatpush1.bf16.msra.mxu0 0
        %1202 = vmatprep.subr.bf16.mxu0 0
        %1203 = vmatpush1.bf16.msra.mxu0 0
        %1204 = vmatprep.subr.bf16.mxu0 0
        %1205 = vmatpush1.bf16.msra.mxu0 0
        %1206 = vmatprep.subr.bf16.mxu0 0
        %1207 = vmatpush1.bf16.msra.mxu0 0
        %1208 = vmatprep.subr.bf16.mxu0 0
        %1209 = vmatpush1.bf16.msra.mxu0 0
        %1210 = vmatprep.subr.bf16.mxu0 0
        %1211 = vmatpush1.bf16.msra.mxu0 0
        %1212 = vmatprep.mubr.bf16.mxu0 0
        %1213 = vmatmul.mubr.bf16.gmra.mrb[0].mxu0 %v1085
        %v1214 = vpop.f32.mrb[0].mxu0
        %v1215 = vadd.f32 %v1125, %v1214
        %v1216 = vpop.f32.mrb[0].mxu0
        %v1217 = vpop.f32.mrb[0].mxu0
        %v1218 = vpop.f32.mrb[0].mxu0
        %1219 = vdwg.mxu0
        %v1236 = vunpack.c.l.b16 %v1102
        %v1237 = vunpack.c.l.b16 %v1103
        %v1238 = vunpack.c.l.b16 %v1104
        %v1239 = vunpack.c.l.b16 %v1105
        %v1240 = vunpack.c.l.b16 %v1106
        %v1241 = vunpack.c.l.b16 %v1107
        %v1242 = vunpack.c.l.b16 %v1108
        %v1243 = vunpack.c.l.b16 %v1109
        %v1244 = vunpack.c.l.b16 %v1110
        %v1245 = vunpack.c.l.b16 %v1111
        %v1246 = vunpack.c.l.b16 %v1112
        %v1247 = vunpack.c.l.b16 %v1113
        %v1248 = vunpack.c.l.b16 %v1114
        %v1249 = vunpack.c.l.b16 %v1115
        %v1250 = vunpack.c.l.b16 %v1116
        %v1251 = vunpack.c.l.b16 %v1117
        %v1252 = vpack.c.b16 %v1237, %v1236
        %v1253 = vpack.c.b16 %v1239, %v1238
        %v1254 = vpack.c.b16 %v1241, %v1240
        %v1255 = vpack.c.b16 %v1243, %v1242
        %v1256 = vpack.c.b16 %v1245, %v1244
        %v1257 = vpack.c.b16 %v1247, %v1246
        %v1258 = vpack.c.b16 %v1249, %v1248
        %v1259 = vpack.c.b16 %v1251, %v1250
        %1268 = vmatprep.subr.bf16.mxu0 0
        %1269 = vmatpush1.bf16.msra.mxu0 %v1252
        %1270 = vmatprep.subr.bf16.mxu0 0
        %1271 = vmatpush1.bf16.msra.mxu0 %v1253
        %1272 = vmatprep.subr.bf16.mxu0 0
        %1273 = vmatpush1.bf16.msra.mxu0 %v1254
        %1274 = vmatprep.subr.bf16.mxu0 0
        %1275 = vmatpush1.bf16.msra.mxu0 %v1255
        %1276 = vmatprep.subr.bf16.mxu0 0
        %1277 = vmatpush1.bf16.msra.mxu0 %v1256
        %1278 = vmatprep.subr.bf16.mxu0 0
        %1279 = vmatpush1.bf16.msra.mxu0 %v1257
        %1280 = vmatprep.subr.bf16.mxu0 0
        %1281 = vmatpush1.bf16.msra.mxu0 %v1258
        %1282 = vmatprep.subr.bf16.mxu0 0
        %1283 = vmatpush1.bf16.msra.mxu0 %v1259
        %1284 = vmatprep.subr.bf16.mxu0 0
        %1285 = vmatpush1.bf16.msra.mxu0 0
        %1286 = vmatprep.subr.bf16.mxu0 0
        %1287 = vmatpush1.bf16.msra.mxu0 0
        %1288 = vmatprep.subr.bf16.mxu0 0
        %1289 = vmatpush1.bf16.msra.mxu0 0
        %1290 = vmatprep.subr.bf16.mxu0 0
        %1291 = vmatpush1.bf16.msra.mxu0 0
        %1292 = vmatprep.subr.bf16.mxu0 0
        %1293 = vmatpush1.bf16.msra.mxu0 0
        %1294 = vmatprep.subr.bf16.mxu0 0
        %1295 = vmatpush1.bf16.msra.mxu0 0
        %1296 = vmatprep.subr.bf16.mxu0 0
        %1297 = vmatpush1.bf16.msra.mxu0 0
        %1298 = vmatprep.subr.bf16.mxu0 0
        %1299 = vmatpush1.bf16.msra.mxu0 0
        %1300 = vmatprep.mubr.bf16.mxu0 0
        %1301 = vmatmul.mubr.bf16.gmra.mrb[0].mxu0 %v1085
        %v1302 = vpop.f32.mrb[0].mxu0
        %v1303 = vadd.f32 %v1129, %v1302
        %v1304 = vpop.f32.mrb[0].mxu0
        %v1305 = vpop.f32.mrb[0].mxu0
        %v1306 = vpop.f32.mrb[0].mxu0
        %1307 = vdwg.mxu0
        %v1308 = vld [vmem:[%s918] sm:$0xf]
        %v1309 = vld [vmem:[%s918 + $0x4] sm:$0xf]
        %v1310 = vld [vmem:[%s918 + $0x8] sm:$0xf]
        %v1311 = vld [vmem:[%s918 + $0xc] sm:$0xf]
        %v1312 = vld [vmem:[%s918 + $0x10] sm:$0xf]
        %v1313 = vld [vmem:[%s918 + $0x14] sm:$0xf]
        %v1314 = vld [vmem:[%s918 + $0x18] sm:$0xf]
        %v1315 = vld [vmem:[%s918 + $0x1c] sm:$0xf]
        %v1316 = vld [vmem:[%s918 + $0x20] sm:$0xf]
        %v1317 = vld [vmem:[%s918 + $0x24] sm:$0xf]
        %v1318 = vld [vmem:[%s918 + $0x28] sm:$0xf]
        %v1319 = vld [vmem:[%s918 + $0x2c] sm:$0xf]
        %v1320 = vld [vmem:[%s918 + $0x30] sm:$0xf]
        %v1321 = vld [vmem:[%s918 + $0x34] sm:$0xf]
        %v1322 = vld [vmem:[%s918 + $0x38] sm:$0xf]
        %v1323 = vld [vmem:[%s918 + $0x3c] sm:$0xf]
        %v1324 = vld [vmem:[%s918 + $0x40] sm:$0xf]
        %v1325 = vld [vmem:[%s918 + $0x44] sm:$0xf]
        %v1326 = vld [vmem:[%s918 + $0x48] sm:$0xf]
        %v1327 = vld [vmem:[%s918 + $0x4c] sm:$0xf]
        %v1328 = vld [vmem:[%s918 + $0x50] sm:$0xf]
        %v1329 = vld [vmem:[%s918 + $0x54] sm:$0xf]
        %v1330 = vld [vmem:[%s918 + $0x58] sm:$0xf]
        %v1331 = vld [vmem:[%s918 + $0x5c] sm:$0xf]
        %v1332 = vld [vmem:[%s918 + $0x60] sm:$0xf]
        %v1333 = vld [vmem:[%s918 + $0x64] sm:$0xf]
        %v1334 = vld [vmem:[%s918 + $0x68] sm:$0xf]
        %v1335 = vld [vmem:[%s918 + $0x6c] sm:$0xf]
        %v1336 = vld [vmem:[%s918 + $0x70] sm:$0xf]
        %v1337 = vld [vmem:[%s918 + $0x74] sm:$0xf]
        %v1338 = vld [vmem:[%s918 + $0x78] sm:$0xf]
        %v1339 = vld [vmem:[%s918 + $0x7c] sm:$0xf]
        %v1340 = vld [vmem:[%s922] sm:$0x1]
        %v1341 = vld [vmem:[%s922 + $0x1] sm:$0x1]
        %v1344 = vlaneseq
        %v1345 = vshrl.u32 %v1344, 7
        %v1346 = vsub.s32 0, %v1345
        %v1347 = vrot.slane %v1340, %v1346
        %v1348 = vlaneseq
        %v1349 = vshrl.u32 %v1348, 7
        %v1350 = vsub.s32 0, %v1349
        %v1351 = vrot.slane %v1341, %v1350
        %v1370 = vunpack.c.l.b16 %v1308
        %v1371 = vunpack.c.l.b16 %v1309
        %v1372 = vunpack.c.l.b16 %v1310
        %v1373 = vunpack.c.l.b16 %v1311
        %v1374 = vunpack.c.l.b16 %v1312
        %v1375 = vunpack.c.l.b16 %v1313
        %v1376 = vunpack.c.l.b16 %v1314
        %v1377 = vunpack.c.l.b16 %v1315
        %v1378 = vunpack.c.l.b16 %v1316
        %v1379 = vunpack.c.l.b16 %v1317
        %v1380 = vunpack.c.l.b16 %v1318
        %v1381 = vunpack.c.l.b16 %v1319
        %v1382 = vunpack.c.l.b16 %v1320
        %v1383 = vunpack.c.l.b16 %v1321
        %v1384 = vunpack.c.l.b16 %v1322
        %v1385 = vunpack.c.l.b16 %v1323
        %v1386 = vpack.c.b16 %v1371, %v1370
        %v1387 = vpack.c.b16 %v1373, %v1372
        %v1388 = vpack.c.b16 %v1375, %v1374
        %v1389 = vpack.c.b16 %v1377, %v1376
        %v1390 = vpack.c.b16 %v1379, %v1378
        %v1391 = vpack.c.b16 %v1381, %v1380
        %v1392 = vpack.c.b16 %v1383, %v1382
        %v1393 = vpack.c.b16 %v1385, %v1384
        %1402 = vmatprep.subr.bf16.mxu0 0
        %1403 = vmatpush1.bf16.msra.mxu0 %v1386
        %1404 = vmatprep.subr.bf16.mxu0 0
        %1405 = vmatpush1.bf16.msra.mxu0 %v1387
        %1406 = vmatprep.subr.bf16.mxu0 0
        %1407 = vmatpush1.bf16.msra.mxu0 %v1388
        %1408 = vmatprep.subr.bf16.mxu0 0
        %1409 = vmatpush1.bf16.msra.mxu0 %v1389
        %1410 = vmatprep.subr.bf16.mxu0 0
        %1411 = vmatpush1.bf16.msra.mxu0 %v1390
        %1412 = vmatprep.subr.bf16.mxu0 0
        %1413 = vmatpush1.bf16.msra.mxu0 %v1391
        %1414 = vmatprep.subr.bf16.mxu0 0
        %1415 = vmatpush1.bf16.msra.mxu0 %v1392
        %1416 = vmatprep.subr.bf16.mxu0 0
        %1417 = vmatpush1.bf16.msra.mxu0 %v1393
        %1418 = vmatprep.subr.bf16.mxu0 0
        %1419 = vmatpush1.bf16.msra.mxu0 0
        %1420 = vmatprep.subr.bf16.mxu0 0
        %1421 = vmatpush1.bf16.msra.mxu0 0
        %1422 = vmatprep.subr.bf16.mxu0 0
        %1423 = vmatpush1.bf16.msra.mxu0 0
        %1424 = vmatprep.subr.bf16.mxu0 0
        %1425 = vmatpush1.bf16.msra.mxu0 0
        %1426 = vmatprep.subr.bf16.mxu0 0
        %1427 = vmatpush1.bf16.msra.mxu0 0
        %1428 = vmatprep.subr.bf16.mxu0 0
        %1429 = vmatpush1.bf16.msra.mxu0 0
        %1430 = vmatprep.subr.bf16.mxu0 0
        %1431 = vmatpush1.bf16.msra.mxu0 0
        %1432 = vmatprep.subr.bf16.mxu0 0
        %1433 = vmatpush1.bf16.msra.mxu0 0
        %1434 = vmatprep.mubr.bf16.mxu0 0
        %1435 = vmatmul.mubr.bf16.gmra.mrb[0].mxu0 %v1085
        %v1436 = vpop.f32.mrb[0].mxu0
        %v1437 = vadd.f32 %v1347, %v1436
        %v1438 = vpop.f32.mrb[0].mxu0
        %v1439 = vpop.f32.mrb[0].mxu0
        %v1440 = vpop.f32.mrb[0].mxu0
        %1441 = vdwg.mxu0
        %v1458 = vunpack.c.l.b16 %v1324
        %v1459 = vunpack.c.l.b16 %v1325
        %v1460 = vunpack.c.l.b16 %v1326
        %v1461 = vunpack.c.l.b16 %v1327
        %v1462 = vunpack.c.l.b16 %v1328
        %v1463 = vunpack.c.l.b16 %v1329
        %v1464 = vunpack.c.l.b16 %v1330
        %v1465 = vunpack.c.l.b16 %v1331
        %v1466 = vunpack.c.l.b16 %v1332
        %v1467 = vunpack.c.l.b16 %v1333
        %v1468 = vunpack.c.l.b16 %v1334
        %v1469 = vunpack.c.l.b16 %v1335
        %v1470 = vunpack.c.l.b16 %v1336
        %v1471 = vunpack.c.l.b16 %v1337
        %v1472 = vunpack.c.l.b16 %v1338
        %v1473 = vunpack.c.l.b16 %v1339
        %v1474 = vpack.c.b16 %v1459, %v1458
        %v1475 = vpack.c.b16 %v1461, %v1460
        %v1476 = vpack.c.b16 %v1463, %v1462
        %v1477 = vpack.c.b16 %v1465, %v1464
        %v1478 = vpack.c.b16 %v1467, %v1466
        %v1479 = vpack.c.b16 %v1469, %v1468
        %v1480 = vpack.c.b16 %v1471, %v1470
        %v1481 = vpack.c.b16 %v1473, %v1472
        %1490 = vmatprep.subr.bf16.mxu0 0
        %1491 = vmatpush1.bf16.msra.mxu0 %v1474
        %1492 = vmatprep.subr.bf16.mxu0 0
        %1493 = vmatpush1.bf16.msra.mxu0 %v1475
        %1494 = vmatprep.subr.bf16.mxu0 0
        %1495 = vmatpush1.bf16.msra.mxu0 %v1476
        %1496 = vmatprep.subr.bf16.mxu0 0
        %1497 = vmatpush1.bf16.msra.mxu0 %v1477
        %1498 = vmatprep.subr.bf16.mxu0 0
        %1499 = vmatpush1.bf16.msra.mxu0 %v1478
        %1500 = vmatprep.subr.bf16.mxu0 0
        %1501 = vmatpush1.bf16.msra.mxu0 %v1479
        %1502 = vmatprep.subr.bf16.mxu0 0
        %1503 = vmatpush1.bf16.msra.mxu0 %v1480
        %1504 = vmatprep.subr.bf16.mxu0 0
        %1505 = vmatpush1.bf16.msra.mxu0 %v1481
        %1506 = vmatprep.subr.bf16.mxu0 0
        %1507 = vmatpush1.bf16.msra.mxu0 0
        %1508 = vmatprep.subr.bf16.mxu0 0
        %1509 = vmatpush1.bf16.msra.mxu0 0
        %1510 = vmatprep.subr.bf16.mxu0 0
        %1511 = vmatpush1.bf16.msra.mxu0 0
        %1512 = vmatprep.subr.bf16.mxu0 0
        %1513 = vmatpush1.bf16.msra.mxu0 0
        %1514 = vmatprep.subr.bf16.mxu0 0
        %1515 = vmatpush1.bf16.msra.mxu0 0
        %1516 = vmatprep.subr.bf16.mxu0 0
        %1517 = vmatpush1.bf16.msra.mxu0 0
        %1518 = vmatprep.subr.bf16.mxu0 0
        %1519 = vmatpush1.bf16.msra.mxu0 0
        %1520 = vmatprep.subr.bf16.mxu0 0
        %1521 = vmatpush1.bf16.msra.mxu0 0
        %1522 = vmatprep.mubr.bf16.mxu0 0
        %1523 = vmatmul.mubr.bf16.gmra.mrb[0].mxu0 %v1085
        %v1524 = vpop.f32.mrb[0].mxu0
        %v1525 = vadd.f32 %v1351, %v1524
        %v1526 = vpop.f32.mrb[0].mxu0
        %v1527 = vpop.f32.mrb[0].mxu0
        %v1528 = vpop.f32.mrb[0].mxu0
        %1529 = vdwg.mxu0
        %v1530 = vld [vmem:[%s927] sm:$0xf]
        %v1531 = vld [vmem:[%s927 + $0x4] sm:$0xf]
        %v1532 = vld [vmem:[%s927 + $0x8] sm:$0xf]
        %v1533 = vld [vmem:[%s927 + $0xc] sm:$0xf]
        %v1534 = vld [vmem:[%s927 + $0x10] sm:$0xf]
        %v1535 = vld [vmem:[%s927 + $0x14] sm:$0xf]
        %v1536 = vld [vmem:[%s927 + $0x18] sm:$0xf]
        %v1537 = vld [vmem:[%s927 + $0x1c] sm:$0xf]
        %v1538 = vld [vmem:[%s927 + $0x20] sm:$0xf]
        %v1539 = vld [vmem:[%s927 + $0x24] sm:$0xf]
        %v1540 = vld [vmem:[%s927 + $0x28] sm:$0xf]
        %v1541 = vld [vmem:[%s927 + $0x2c] sm:$0xf]
        %v1542 = vld [vmem:[%s927 + $0x30] sm:$0xf]
        %v1543 = vld [vmem:[%s927 + $0x34] sm:$0xf]
        %v1544 = vld [vmem:[%s927 + $0x38] sm:$0xf]
        %v1545 = vld [vmem:[%s927 + $0x3c] sm:$0xf]
        %v1546 = vld [vmem:[%s927 + $0x40] sm:$0xf]
        %v1547 = vld [vmem:[%s927 + $0x44] sm:$0xf]
        %v1548 = vld [vmem:[%s927 + $0x48] sm:$0xf]
        %v1549 = vld [vmem:[%s927 + $0x4c] sm:$0xf]
        %v1550 = vld [vmem:[%s927 + $0x50] sm:$0xf]
        %v1551 = vld [vmem:[%s927 + $0x54] sm:$0xf]
        %v1552 = vld [vmem:[%s927 + $0x58] sm:$0xf]
        %v1553 = vld [vmem:[%s927 + $0x5c] sm:$0xf]
        %v1554 = vld [vmem:[%s927 + $0x60] sm:$0xf]
        %v1555 = vld [vmem:[%s927 + $0x64] sm:$0xf]
        %v1556 = vld [vmem:[%s927 + $0x68] sm:$0xf]
        %v1557 = vld [vmem:[%s927 + $0x6c] sm:$0xf]
        %v1558 = vld [vmem:[%s927 + $0x70] sm:$0xf]
        %v1559 = vld [vmem:[%s927 + $0x74] sm:$0xf]
        %v1560 = vld [vmem:[%s927 + $0x78] sm:$0xf]
        %v1561 = vld [vmem:[%s927 + $0x7c] sm:$0xf]
        %v1562 = vld [vmem:[%s931] sm:$0x1]
        %v1563 = vld [vmem:[%s931 + $0x1] sm:$0x1]
        %v1566 = vlaneseq
        %v1567 = vshrl.u32 %v1566, 7
        %v1568 = vsub.s32 0, %v1567
        %v1569 = vrot.slane %v1562, %v1568
        %v1570 = vlaneseq
        %v1571 = vshrl.u32 %v1570, 7
        %v1572 = vsub.s32 0, %v1571
        %v1573 = vrot.slane %v1563, %v1572
        %v1592 = vunpack.c.l.b16 %v1530
        %v1593 = vunpack.c.l.b16 %v1531
        %v1594 = vunpack.c.l.b16 %v1532
        %v1595 = vunpack.c.l.b16 %v1533
        %v1596 = vunpack.c.l.b16 %v1534
        %v1597 = vunpack.c.l.b16 %v1535
        %v1598 = vunpack.c.l.b16 %v1536
        %v1599 = vunpack.c.l.b16 %v1537
        %v1600 = vunpack.c.l.b16 %v1538
        %v1601 = vunpack.c.l.b16 %v1539
        %v1602 = vunpack.c.l.b16 %v1540
        %v1603 = vunpack.c.l.b16 %v1541
        %v1604 = vunpack.c.l.b16 %v1542
        %v1605 = vunpack.c.l.b16 %v1543
        %v1606 = vunpack.c.l.b16 %v1544
        %v1607 = vunpack.c.l.b16 %v1545
        %v1608 = vpack.c.b16 %v1593, %v1592
        %v1609 = vpack.c.b16 %v1595, %v1594
        %v1610 = vpack.c.b16 %v1597, %v1596
        %v1611 = vpack.c.b16 %v1599, %v1598
        %v1612 = vpack.c.b16 %v1601, %v1600
        %v1613 = vpack.c.b16 %v1603, %v1602
        %v1614 = vpack.c.b16 %v1605, %v1604
        %v1615 = vpack.c.b16 %v1607, %v1606
        %1624 = vmatprep.subr.bf16.mxu0 0
        %1625 = vmatpush1.bf16.msra.mxu0 %v1608
        %1626 = vmatprep.subr.bf16.mxu0 0
        %1627 = vmatpush1.bf16.msra.mxu0 %v1609
        %1628 = vmatprep.subr.bf16.mxu0 0
        %1629 = vmatpush1.bf16.msra.mxu0 %v1610
        %1630 = vmatprep.subr.bf16.mxu0 0
        %1631 = vmatpush1.bf16.msra.mxu0 %v1611
        %1632 = vmatprep.subr.bf16.mxu0 0
        %1633 = vmatpush1.bf16.msra.mxu0 %v1612
        %1634 = vmatprep.subr.bf16.mxu0 0
        %1635 = vmatpush1.bf16.msra.mxu0 %v1613
        %1636 = vmatprep.subr.bf16.mxu0 0
        %1637 = vmatpush1.bf16.msra.mxu0 %v1614
        %1638 = vmatprep.subr.bf16.mxu0 0
        %1639 = vmatpush1.bf16.msra.mxu0 %v1615
        %1640 = vmatprep.subr.bf16.mxu0 0
        %1641 = vmatpush1.bf16.msra.mxu0 0
        %1642 = vmatprep.subr.bf16.mxu0 0
        %1643 = vmatpush1.bf16.msra.mxu0 0
        %1644 = vmatprep.subr.bf16.mxu0 0
        %1645 = vmatpush1.bf16.msra.mxu0 0
        %1646 = vmatprep.subr.bf16.mxu0 0
        %1647 = vmatpush1.bf16.msra.mxu0 0
        %1648 = vmatprep.subr.bf16.mxu0 0
        %1649 = vmatpush1.bf16.msra.mxu0 0
        %1650 = vmatprep.subr.bf16.mxu0 0
        %1651 = vmatpush1.bf16.msra.mxu0 0
        %1652 = vmatprep.subr.bf16.mxu0 0
        %1653 = vmatpush1.bf16.msra.mxu0 0
        %1654 = vmatprep.subr.bf16.mxu0 0
        %1655 = vmatpush1.bf16.msra.mxu0 0
        %1656 = vmatprep.mubr.bf16.mxu0 0
        %1657 = vmatmul.mubr.bf16.gmra.mrb[0].mxu0 %v1085
        %v1658 = vpop.f32.mrb[0].mxu0
        %v1659 = vadd.f32 %v1569, %v1658
        %v1660 = vpop.f32.mrb[0].mxu0
        %v1661 = vpop.f32.mrb[0].mxu0
        %v1662 = vpop.f32.mrb[0].mxu0
        %1663 = vdwg.mxu0
        %v1680 = vunpack.c.l.b16 %v1546
        %v1681 = vunpack.c.l.b16 %v1547
        %v1682 = vunpack.c.l.b16 %v1548
        %v1683 = vunpack.c.l.b16 %v1549
        %v1684 = vunpack.c.l.b16 %v1550
        %v1685 = vunpack.c.l.b16 %v1551
        %v1686 = vunpack.c.l.b16 %v1552
        %v1687 = vunpack.c.l.b16 %v1553
        %v1688 = vunpack.c.l.b16 %v1554
        %v1689 = vunpack.c.l.b16 %v1555
        %v1690 = vunpack.c.l.b16 %v1556
        %v1691 = vunpack.c.l.b16 %v1557
        %v1692 = vunpack.c.l.b16 %v1558
        %v1693 = vunpack.c.l.b16 %v1559
        %v1694 = vunpack.c.l.b16 %v1560
        %v1695 = vunpack.c.l.b16 %v1561
        %v1696 = vpack.c.b16 %v1681, %v1680
        %v1697 = vpack.c.b16 %v1683, %v1682
        %v1698 = vpack.c.b16 %v1685, %v1684
        %v1699 = vpack.c.b16 %v1687, %v1686
        %v1700 = vpack.c.b16 %v1689, %v1688
        %v1701 = vpack.c.b16 %v1691, %v1690
        %v1702 = vpack.c.b16 %v1693, %v1692
        %v1703 = vpack.c.b16 %v1695, %v1694
        %1712 = vmatprep.subr.bf16.mxu0 0
        %1713 = vmatpush1.bf16.msra.mxu0 %v1696
        %1714 = vmatprep.subr.bf16.mxu0 0
        %1715 = vmatpush1.bf16.msra.mxu0 %v1697
        %1716 = vmatprep.subr.bf16.mxu0 0
        %1717 = vmatpush1.bf16.msra.mxu0 %v1698
        %1718 = vmatprep.subr.bf16.mxu0 0
        %1719 = vmatpush1.bf16.msra.mxu0 %v1699
        %1720 = vmatprep.subr.bf16.mxu0 0
        %1721 = vmatpush1.bf16.msra.mxu0 %v1700
        %1722 = vmatprep.subr.bf16.mxu0 0
        %1723 = vmatpush1.bf16.msra.mxu0 %v1701
        %1724 = vmatprep.subr.bf16.mxu0 0
        %1725 = vmatpush1.bf16.msra.mxu0 %v1702
        %1726 = vmatprep.subr.bf16.mxu0 0
        %1727 = vmatpush1.bf16.msra.mxu0 %v1703
        %1728 = vmatprep.subr.bf16.mxu0 0
        %1729 = vmatpush1.bf16.msra.mxu0 0
        %1730 = vmatprep.subr.bf16.mxu0 0
        %1731 = vmatpush1.bf16.msra.mxu0 0
        %1732 = vmatprep.subr.bf16.mxu0 0
        %1733 = vmatpush1.bf16.msra.mxu0 0
        %1734 = vmatprep.subr.bf16.mxu0 0
        %1735 = vmatpush1.bf16.msra.mxu0 0
        %1736 = vmatprep.subr.bf16.mxu0 0
        %1737 = vmatpush1.bf16.msra.mxu0 0
        %1738 = vmatprep.subr.bf16.mxu0 0
        %1739 = vmatpush1.bf16.msra.mxu0 0
        %1740 = vmatprep.subr.bf16.mxu0 0
        %1741 = vmatpush1.bf16.msra.mxu0 0
        %1742 = vmatprep.subr.bf16.mxu0 0
        %1743 = vmatpush1.bf16.msra.mxu0 0
        %1744 = vmatprep.mubr.bf16.mxu0 0
        %1745 = vmatmul.mubr.bf16.gmra.mrb[0].mxu0 %v1085
        %v1746 = vpop.f32.mrb[0].mxu0
        %v1747 = vadd.f32 %v1573, %v1746
        %v1748 = vpop.f32.mrb[0].mxu0
        %v1749 = vpop.f32.mrb[0].mxu0
        %v1750 = vpop.f32.mrb[0].mxu0
        %1751 = vdwg.mxu0
        %v1752 = vmul.f32 %v1215, 0.125
        %v1753 = vmul.f32 %v1303, 0.125
        %v1754 = vpack.c.bf16 %v1752, %v1752
        %v1755 = vpack.c.bf16 %v1753, %v1753
        %v1756 = vpack.c.bf16 %v1437, %v1437
        %v1757 = vpack.c.bf16 %v1525, %v1525
        %v1758 = vpack.c.bf16 %v1659, %v1659
        %v1759 = vpack.c.bf16 %v1747, %v1747
        %vm1760 = vcmask 523264
        %v1762 = vsel %vm1760, %v1754, 0
        %v1765 = vsel %vm1760, %v1756, 0
        %1767 = vmatprep.subr.bf16.mxu0 0
        %1768 = vmatpush1.bf16.xpose.msra.mxu0 %v1765
        %1769 = vmatprep.subr.bf16.mxu0 0
        %1770 = vmatpush1.bf16.xpose.msra.mxu0 0
        %1771 = vmatprep.subr.bf16.mxu0 0
        %1772 = vmatpush1.bf16.xpose.msra.mxu0 0
        %1773 = vmatprep.subr.bf16.mxu0 0
        %1774 = vmatpush1.bf16.xpose.msra.mxu0 0
        %1775 = vmatprep.subr.bf16.mxu0 0
        %1776 = vmatpush1.bf16.xpose.msra.mxu0 0
        %1777 = vmatprep.subr.bf16.mxu0 0
        %1778 = vmatpush1.bf16.xpose.msra.mxu0 0
        %1779 = vmatprep.subr.bf16.mxu0 0
        %1780 = vmatpush1.bf16.xpose.msra.mxu0 0
        %1781 = vmatprep.subr.bf16.mxu0 0
        %1782 = vmatpush1.bf16.xpose.msra.mxu0 0
        %1783 = vmatprep.subr.bf16.mxu0 0
        %1784 = vmatpush1.bf16.xpose.msra.mxu0 0
        %1785 = vmatprep.subr.bf16.mxu0 0
        %1786 = vmatpush1.bf16.xpose.msra.mxu0 0
        %1787 = vmatprep.subr.bf16.mxu0 0
        %1788 = vmatpush1.bf16.xpose.msra.mxu0 0
        %1789 = vmatprep.subr.bf16.mxu0 0
        %1790 = vmatpush1.bf16.xpose.msra.mxu0 0
        %1791 = vmatprep.subr.bf16.mxu0 0
        %1792 = vmatpush1.bf16.xpose.msra.mxu0 0
        %1793 = vmatprep.subr.bf16.mxu0 0
        %1794 = vmatpush1.bf16.xpose.msra.mxu0 0
        %1795 = vmatprep.subr.bf16.mxu0 0
        %1796 = vmatpush1.bf16.xpose.msra.mxu0 0
        %1797 = vmatprep.subr.bf16.mxu0 0
        %1798 = vmatpush1.bf16.xpose.msra.mxu0 0
        %1799 = vmatprep.mubr.bf16.mxu0 0
        %1800 = vmatmul.mubr.bf16.gmra.mrb[0].mxu0 %v1762
        %v1801 = vpop.f32.mrb[0].mxu0
        %v1802 = vadd.f32 0.0, %v1801
        %v1803 = vpop.f32.mrb[0].mxu0
        %v1804 = vpop.f32.mrb[0].mxu0
        %v1805 = vpop.f32.mrb[0].mxu0
        %1806 = vdwg.mxu0
        %v1808 = vsel %vm1760, %v1755, 0
        %v1811 = vsel %vm1760, %v1757, 0
        %1813 = vmatprep.subr.bf16.mxu0 0
        %1814 = vmatpush1.bf16.xpose.msra.mxu0 %v1811
        %1815 = vmatprep.subr.bf16.mxu0 0
        %1816 = vmatpush1.bf16.xpose.msra.mxu0 0
        %1817 = vmatprep.subr.bf16.mxu0 0
        %1818 = vmatpush1.bf16.xpose.msra.mxu0 0
        %1819 = vmatprep.subr.bf16.mxu0 0
        %1820 = vmatpush1.bf16.xpose.msra.mxu0 0
        %1821 = vmatprep.subr.bf16.mxu0 0
        %1822 = vmatpush1.bf16.xpose.msra.mxu0 0
        %1823 = vmatprep.subr.bf16.mxu0 0
        %1824 = vmatpush1.bf16.xpose.msra.mxu0 0
        %1825 = vmatprep.subr.bf16.mxu0 0
        %1826 = vmatpush1.bf16.xpose.msra.mxu0 0
        %1827 = vmatprep.subr.bf16.mxu0 0
        %1828 = vmatpush1.bf16.xpose.msra.mxu0 0
        %1829 = vmatprep.subr.bf16.mxu0 0
        %1830 = vmatpush1.bf16.xpose.msra.mxu0 0
        %1831 = vmatprep.subr.bf16.mxu0 0
        %1832 = vmatpush1.bf16.xpose.msra.mxu0 0
        %1833 = vmatprep.subr.bf16.mxu0 0
        %1834 = vmatpush1.bf16.xpose.msra.mxu0 0
        %1835 = vmatprep.subr.bf16.mxu0 0
        %1836 = vmatpush1.bf16.xpose.msra.mxu0 0
        %1837 = vmatprep.subr.bf16.mxu0 0
        %1838 = vmatpush1.bf16.xpose.msra.mxu0 0
        %1839 = vmatprep.subr.bf16.mxu0 0
        %1840 = vmatpush1.bf16.xpose.msra.mxu0 0
        %1841 = vmatprep.subr.bf16.mxu0 0
        %1842 = vmatpush1.bf16.xpose.msra.mxu0 0
        %1843 = vmatprep.subr.bf16.mxu0 0
        %1844 = vmatpush1.bf16.xpose.msra.mxu0 0
        %1845 = vmatprep.mubr.bf16.mxu0 0
        %1846 = vmatmul.mubr.bf16.gmra.mrb[0].mxu0 %v1808
        %v1847 = vpop.f32.mrb[0].mxu0
        %v1848 = vadd.f32 0.0, %v1847
        %v1849 = vpop.f32.mrb[0].mxu0
        %v1850 = vpop.f32.mrb[0].mxu0
        %v1851 = vpop.f32.mrb[0].mxu0
        %1852 = vdwg.mxu0
        %vm1853 = vcmask 64512
        %v1854 = vsel %vm1853, %v1802, -inf
        %1855 = vmax.xlane.f32.xlu0 %v1854
        %v1856 = vpop.xlane.xlu0 %1855
        %v1857 = vsel %vm1853, %v1848, -inf
        %1858 = vmax.xlane.f32.xlu0 %v1857
        %v1859 = vpop.xlane.xlu0 %1858
        %v1860 = vsub.f32 %v1802, %v1856
        %v1861 = vsub.f32 %v1848, %v1859
        %v1862 = vmul.f32 %v1860, 1.442695
        %v1863 = vpow.pop %v1862
        %v1864 = vmul.f32 %v1861, 1.442695
        %v1865 = vpow.pop %v1864
        %v1866 = vsel %vm1853, %v1863, 0.0
        %1867 = vadd.xlane.f32.xlu0 %v1866
        %v1868 = vpop.xlane.xlu0 %1867
        %v1869 = vsel %vm1853, %v1865, 0.0
        %1870 = vadd.xlane.f32.xlu0 %v1869
        %v1871 = vpop.xlane.xlu0 %1870
        %v1872 = vrcp.pop %v1868
        %v1873 = vrcp.pop %v1871
        %v1874 = vmul.f32 %v1863, %v1872
        %v1875 = vmul.f32 %v1865, %v1873
        %v1876 = vpack.c.bf16 %v1874, %v1874
        %v1877 = vpack.c.bf16 %v1875, %v1875
        %v1879 = vsel %vm1853, %v1876, 0
        %vm1881 = vcmask 1043456
        %v1883 = vsel %vm1881, %v1758, 0
        %1885 = vmatprep.subr.bf16.mxu0 0
        %1886 = vmatpush1.bf16.msra.mxu0 %v1883
        %1887 = vmatprep.subr.bf16.mxu0 0
        %1888 = vmatpush1.bf16.msra.mxu0 0
        %1889 = vmatprep.subr.bf16.mxu0 0
        %1890 = vmatpush1.bf16.msra.mxu0 0
        %1891 = vmatprep.subr.bf16.mxu0 0
        %1892 = vmatpush1.bf16.msra.mxu0 0
        %1893 = vmatprep.subr.bf16.mxu0 0
        %1894 = vmatpush1.bf16.msra.mxu0 0
        %1895 = vmatprep.subr.bf16.mxu0 0
        %1896 = vmatpush1.bf16.msra.mxu0 0
        %1897 = vmatprep.subr.bf16.mxu0 0
        %1898 = vmatpush1.bf16.msra.mxu0 0
        %1899 = vmatprep.subr.bf16.mxu0 0
        %1900 = vmatpush1.bf16.msra.mxu0 0
        %1901 = vmatprep.subr.bf16.mxu0 0
        %1902 = vmatpush1.bf16.msra.mxu0 0
        %1903 = vmatprep.subr.bf16.mxu0 0
        %1904 = vmatpush1.bf16.msra.mxu0 0
        %1905 = vmatprep.subr.bf16.mxu0 0
        %1906 = vmatpush1.bf16.msra.mxu0 0
        %1907 = vmatprep.subr.bf16.mxu0 0
        %1908 = vmatpush1.bf16.msra.mxu0 0
        %1909 = vmatprep.subr.bf16.mxu0 0
        %1910 = vmatpush1.bf16.msra.mxu0 0
        %1911 = vmatprep.subr.bf16.mxu0 0
        %1912 = vmatpush1.bf16.msra.mxu0 0
        %1913 = vmatprep.subr.bf16.mxu0 0
        %1914 = vmatpush1.bf16.msra.mxu0 0
        %1915 = vmatprep.subr.bf16.mxu0 0
        %1916 = vmatpush1.bf16.msra.mxu0 0
        %1917 = vmatprep.mubr.bf16.mxu0 0
        %1918 = vmatmul.mubr.bf16.gmra.mrb[0].mxu0 %v1879
        %v1919 = vpop.f32.mrb[0].mxu0
        %v1920 = vadd.f32 0.0, %v1919
        %v1921 = vpop.f32.mrb[0].mxu0
        %v1922 = vpop.f32.mrb[0].mxu0
        %v1923 = vpop.f32.mrb[0].mxu0
        %1924 = vdwg.mxu0
        %v1926 = vsel %vm1853, %v1877, 0
        %v1929 = vsel %vm1881, %v1759, 0
        %1931 = vmatprep.subr.bf16.mxu0 0
        %1932 = vmatpush1.bf16.msra.mxu0 %v1929
        %1933 = vmatprep.subr.bf16.mxu0 0
        %1934 = vmatpush1.bf16.msra.mxu0 0
        %1935 = vmatprep.subr.bf16.mxu0 0
        %1936 = vmatpush1.bf16.msra.mxu0 0
        %1937 = vmatprep.subr.bf16.mxu0 0
        %1938 = vmatpush1.bf16.msra.mxu0 0
        %1939 = vmatprep.subr.bf16.mxu0 0
        %1940 = vmatpush1.bf16.msra.mxu0 0
        %1941 = vmatprep.subr.bf16.mxu0 0
        %1942 = vmatpush1.bf16.msra.mxu0 0
        %1943 = vmatprep.subr.bf16.mxu0 0
        %1944 = vmatpush1.bf16.msra.mxu0 0
        %1945 = vmatprep.subr.bf16.mxu0 0
        %1946 = vmatpush1.bf16.msra.mxu0 0
        %1947 = vmatprep.subr.bf16.mxu0 0
        %1948 = vmatpush1.bf16.msra.mxu0 0
        %1949 = vmatprep.subr.bf16.mxu0 0
        %1950 = vmatpush1.bf16.msra.mxu0 0
        %1951 = vmatprep.subr.bf16.mxu0 0
        %1952 = vmatpush1.bf16.msra.mxu0 0
        %1953 = vmatprep.subr.bf16.mxu0 0
        %1954 = vmatpush1.bf16.msra.mxu0 0
        %1955 = vmatprep.subr.bf16.mxu0 0
        %1956 = vmatpush1.bf16.msra.mxu0 0
        %1957 = vmatprep.subr.bf16.mxu0 0
        %1958 = vmatpush1.bf16.msra.mxu0 0
        %1959 = vmatprep.subr.bf16.mxu0 0
        %1960 = vmatpush1.bf16.msra.mxu0 0
        %1961 = vmatprep.subr.bf16.mxu0 0
        %1962 = vmatpush1.bf16.msra.mxu0 0
        %1963 = vmatprep.mubr.bf16.mxu0 0
        %1964 = vmatmul.mubr.bf16.gmra.mrb[0].mxu0 %v1926
        %v1965 = vpop.f32.mrb[0].mxu0
        %v1966 = vadd.f32 0.0, %v1965
        %v1967 = vpop.f32.mrb[0].mxu0
        %v1968 = vpop.f32.mrb[0].mxu0
        %v1969 = vpop.f32.mrb[0].mxu0
        %1970 = vdwg.mxu0
        %v1971 = vpack.c.bf16 %v1920, %v1920
        %v1972 = vpack.c.bf16 %v1966, %v1966
        %v1973 = vld [vmem:[%s936] sm:$0xf]
        %v1974 = vld [vmem:[%s936 + $0x4] sm:$0xf]
        %v1975 = vld [vmem:[%s936 + $0x8] sm:$0xf]
        %v1976 = vld [vmem:[%s936 + $0xc] sm:$0xf]
        %v1977 = vld [vmem:[%s936 + $0x10] sm:$0xf]
        %v1978 = vld [vmem:[%s936 + $0x14] sm:$0xf]
        %v1979 = vld [vmem:[%s936 + $0x18] sm:$0xf]
        %v1980 = vld [vmem:[%s936 + $0x1c] sm:$0xf]
        %v1981 = vld [vmem:[%s936 + $0x20] sm:$0xf]
        %v1982 = vld [vmem:[%s936 + $0x24] sm:$0xf]
        %v1983 = vld [vmem:[%s936 + $0x28] sm:$0xf]
        %v1984 = vld [vmem:[%s936 + $0x2c] sm:$0xf]
        %v1985 = vld [vmem:[%s936 + $0x30] sm:$0xf]
        %v1986 = vld [vmem:[%s936 + $0x34] sm:$0xf]
        %v1987 = vld [vmem:[%s936 + $0x38] sm:$0xf]
        %v1988 = vld [vmem:[%s936 + $0x3c] sm:$0xf]
        %v1997 = vunpack.c.l.b16 %v1973
        %v1998 = vunpack.c.l.b16 %v1974
        %v1999 = vunpack.c.l.b16 %v1975
        %v2000 = vunpack.c.l.b16 %v1976
        %v2001 = vunpack.c.l.b16 %v1977
        %v2002 = vunpack.c.l.b16 %v1978
        %v2003 = vunpack.c.l.b16 %v1979
        %v2004 = vunpack.c.l.b16 %v1980
        %v2005 = vpack.c.b16 %v1998, %v1997
        %v2006 = vpack.c.b16 %v2000, %v1999
        %v2007 = vpack.c.b16 %v2002, %v2001
        %v2008 = vpack.c.b16 %v2004, %v2003
        %v2014 = vsel %vm1760, %v1971, 0
        %2016 = vmatprep.subr.bf16.mxu0 0
        %2017 = vmatpush1.bf16.msra.mxu0 %v2005
        %2018 = vmatprep.subr.bf16.mxu0 0
        %2019 = vmatpush1.bf16.msra.mxu0 %v2006
        %2020 = vmatprep.subr.bf16.mxu0 0
        %2021 = vmatpush1.bf16.msra.mxu0 %v2007
        %2022 = vmatprep.subr.bf16.mxu0 0
        %2023 = vmatpush1.bf16.msra.mxu0 %v2008
        %2024 = vmatprep.subr.bf16.mxu0 0
        %2025 = vmatpush1.bf16.msra.mxu0 0
        %2026 = vmatprep.subr.bf16.mxu0 0
        %2027 = vmatpush1.bf16.msra.mxu0 0
        %2028 = vmatprep.subr.bf16.mxu0 0
        %2029 = vmatpush1.bf16.msra.mxu0 0
        %2030 = vmatprep.subr.bf16.mxu0 0
        %2031 = vmatpush1.bf16.msra.mxu0 0
        %2032 = vmatprep.subr.bf16.mxu0 0
        %2033 = vmatpush1.bf16.msra.mxu0 0
        %2034 = vmatprep.subr.bf16.mxu0 0
        %2035 = vmatpush1.bf16.msra.mxu0 0
        %2036 = vmatprep.subr.bf16.mxu0 0
        %2037 = vmatpush1.bf16.msra.mxu0 0
        %2038 = vmatprep.subr.bf16.mxu0 0
        %2039 = vmatpush1.bf16.msra.mxu0 0
        %2040 = vmatprep.subr.bf16.mxu0 0
        %2041 = vmatpush1.bf16.msra.mxu0 0
        %2042 = vmatprep.subr.bf16.mxu0 0
        %2043 = vmatpush1.bf16.msra.mxu0 0
        %2044 = vmatprep.subr.bf16.mxu0 0
        %2045 = vmatpush1.bf16.msra.mxu0 0
        %2046 = vmatprep.subr.bf16.mxu0 0
        %2047 = vmatpush1.bf16.msra.mxu0 0
        %2048 = vmatprep.mubr.bf16.mxu0 0
        %2049 = vmatmul.mubr.bf16.gmra.mrb[0].mxu0 %v2014
        %v2050 = vpop.f32.mrb[0].mxu0
        %v2051 = vadd.f32 0.0, %v2050
        %v2052 = vpop.f32.mrb[0].mxu0
        %v2053 = vpop.f32.mrb[0].mxu0
        %v2054 = vpop.f32.mrb[0].mxu0
        %2055 = vdwg.mxu0
        %v2064 = vunpack.c.l.b16 %v1981
        %v2065 = vunpack.c.l.b16 %v1982
        %v2066 = vunpack.c.l.b16 %v1983
        %v2067 = vunpack.c.l.b16 %v1984
        %v2068 = vunpack.c.l.b16 %v1985
        %v2069 = vunpack.c.l.b16 %v1986
        %v2070 = vunpack.c.l.b16 %v1987
        %v2071 = vunpack.c.l.b16 %v1988
        %v2072 = vpack.c.b16 %v2065, %v2064
        %v2073 = vpack.c.b16 %v2067, %v2066
        %v2074 = vpack.c.b16 %v2069, %v2068
        %v2075 = vpack.c.b16 %v2071, %v2070
        %v2081 = vsel %vm1760, %v1972, 0
        %2083 = vmatprep.subr.bf16.mxu0 0
        %2084 = vmatpush1.bf16.msra.mxu0 %v2072
        %2085 = vmatprep.subr.bf16.mxu0 0
        %2086 = vmatpush1.bf16.msra.mxu0 %v2073
        %2087 = vmatprep.subr.bf16.mxu0 0
        %2088 = vmatpush1.bf16.msra.mxu0 %v2074
        %2089 = vmatprep.subr.bf16.mxu0 0
        %2090 = vmatpush1.bf16.msra.mxu0 %v2075
        %2091 = vmatprep.subr.bf16.mxu0 0
        %2092 = vmatpush1.bf16.msra.mxu0 0
        %2093 = vmatprep.subr.bf16.mxu0 0
        %2094 = vmatpush1.bf16.msra.mxu0 0
        %2095 = vmatprep.subr.bf16.mxu0 0
        %2096 = vmatpush1.bf16.msra.mxu0 0
        %2097 = vmatprep.subr.bf16.mxu0 0
        %2098 = vmatpush1.bf16.msra.mxu0 0
        %2099 = vmatprep.subr.bf16.mxu0 0
        %2100 = vmatpush1.bf16.msra.mxu0 0
        %2101 = vmatprep.subr.bf16.mxu0 0
        %2102 = vmatpush1.bf16.msra.mxu0 0
        %2103 = vmatprep.subr.bf16.mxu0 0
        %2104 = vmatpush1.bf16.msra.mxu0 0
        %2105 = vmatprep.subr.bf16.mxu0 0
        %2106 = vmatpush1.bf16.msra.mxu0 0
        %2107 = vmatprep.subr.bf16.mxu0 0
        %2108 = vmatpush1.bf16.msra.mxu0 0
        %2109 = vmatprep.subr.bf16.mxu0 0
        %2110 = vmatpush1.bf16.msra.mxu0 0
        %2111 = vmatprep.subr.bf16.mxu0 0
        %2112 = vmatpush1.bf16.msra.mxu0 0
        %2113 = vmatprep.subr.bf16.mxu0 0
        %2114 = vmatpush1.bf16.msra.mxu0 0
        %2115 = vmatprep.mubr.bf16.mxu0 0
        %2116 = vmatmul.mubr.bf16.gmra.mrb[0].mxu0 %v2081
        %v2117 = vpop.f32.mrb[0].mxu0
        %v2118 = vadd.f32 0.0, %v2117
        %v2119 = vpop.f32.mrb[0].mxu0
        %v2120 = vpop.f32.mrb[0].mxu0
        %v2121 = vpop.f32.mrb[0].mxu0
        %2122 = vdwg.mxu0
        %v2123 = vadd.f32 %v2051, %v2118
        %v2124 = vld [vmem:[%s939] sm:$0x1]
        %v2126 = vlaneseq
        %v2127 = vshrl.u32 %v2126, 7
        %v2128 = vsub.s32 0, %v2127
        %v2129 = vrot.slane %v2124, %v2128
        %v2131 = vadd.f32 %v2123, %v2129
        %v2132 = vadd.f32 %v1056, %v2131
        %v2133 = vld [vmem:[%s942] sm:$0x1]
        %v2134 = vld [vmem:[%s945] sm:$0x1]
        %2135 = vadd.xlane.f32.xlu0 %v2132
        %v2136 = vpop.xlane.xlu0 %2135
        %v2137 = vmul.f32 %v2136, %v1061
        %v2138 = vsub.f32 %v2132, %v2137
        %v2139 = vmul.f32 %v2138, %v2138
        %2140 = vadd.xlane.f32.xlu0 %v2139
        %v2141 = vpop.xlane.xlu0 %2140
        %v2142 = vmul.f32 %v2141, %v1061
        %v2143 = vadd.f32 %v2142, 1e-12
        %v2144 = vrsqrt.pop %v2143
        %v2145 = vmul.f32 %v2138, %v2144
        %v2147 = vlaneseq
        %v2148 = vshrl.u32 %v2147, 7
        %v2149 = vsub.s32 0, %v2148
        %v2150 = vrot.slane %v2133, %v2149
        %v2152 = vmul.f32 %v2145, %v2150
        %v2154 = vlaneseq
        %v2155 = vshrl.u32 %v2154, 7
        %v2156 = vsub.s32 0, %v2155
        %v2157 = vrot.slane %v2134, %v2156
        %v2159 = vadd.f32 %v2152, %v2157
        %v2160 = vpack.c.bf16 %v2159, %v2159
        %v2161 = vld [vmem:[%s950] sm:$0xff]
        %v2162 = vld [vmem:[%s950 + $0x8] sm:$0xff]
        %v2163 = vld [vmem:[%s950 + $0x10] sm:$0xff]
        %v2164 = vld [vmem:[%s950 + $0x18] sm:$0xff]
        %v2165 = vld [vmem:[%s950 + $0x20] sm:$0xff]
        %v2166 = vld [vmem:[%s950 + $0x28] sm:$0xff]
        %v2167 = vld [vmem:[%s950 + $0x30] sm:$0xff]
        %v2168 = vld [vmem:[%s950 + $0x38] sm:$0xff]
        %v2169 = vld [vmem:[%s950 + $0x40] sm:$0xff]
        %v2170 = vld [vmem:[%s950 + $0x48] sm:$0xff]
        %v2171 = vld [vmem:[%s950 + $0x50] sm:$0xff]
        %v2172 = vld [vmem:[%s950 + $0x58] sm:$0xff]
        %v2173 = vld [vmem:[%s950 + $0x60] sm:$0xff]
        %v2174 = vld [vmem:[%s950 + $0x68] sm:$0xff]
        %v2175 = vld [vmem:[%s950 + $0x70] sm:$0xff]
        %v2176 = vld [vmem:[%s950 + $0x78] sm:$0xff]
        %v2177 = vld [vmem:[%s954] sm:$0x3]
        %v2179 = vlaneseq
        %v2180 = vshrl.u32 %v2179, 7
        %v2181 = vsub.s32 0, %v2180
        %v2182 = vrot.slane %v2177, %v2181
        %v2183 = vlaneseq
        %v2184 = vshrl.u32 %v2183, 7
        %v2185 = vsub.s32 1, %v2184
        %v2186 = vrot.slane %v2177, %v2185
        %v2205 = vunpack.c.l.b16 %v2161
        %v2206 = vunpack.c.h.b16 %v2161
        %v2207 = vunpack.c.l.b16 %v2162
        %v2208 = vunpack.c.h.b16 %v2162
        %v2209 = vunpack.c.l.b16 %v2163
        %v2210 = vunpack.c.h.b16 %v2163
        %v2211 = vunpack.c.l.b16 %v2164
        %v2212 = vunpack.c.h.b16 %v2164
        %v2213 = vunpack.c.l.b16 %v2165
        %v2214 = vunpack.c.h.b16 %v2165
        %v2215 = vunpack.c.l.b16 %v2166
        %v2216 = vunpack.c.h.b16 %v2166
        %v2217 = vunpack.c.l.b16 %v2167
        %v2218 = vunpack.c.h.b16 %v2167
        %v2219 = vunpack.c.l.b16 %v2168
        %v2220 = vunpack.c.h.b16 %v2168
        %v2221 = vunpack.c.l.b16 %v2169
        %v2222 = vunpack.c.h.b16 %v2169
        %v2223 = vunpack.c.l.b16 %v2170
        %v2224 = vunpack.c.h.b16 %v2170
        %v2225 = vunpack.c.l.b16 %v2171
        %v2226 = vunpack.c.h.b16 %v2171
        %v2227 = vunpack.c.l.b16 %v2172
        %v2228 = vunpack.c.h.b16 %v2172
        %v2229 = vunpack.c.l.b16 %v2173
        %v2230 = vunpack.c.h.b16 %v2173
        %v2231 = vunpack.c.l.b16 %v2174
        %v2232 = vunpack.c.h.b16 %v2174
        %v2233 = vunpack.c.l.b16 %v2175
        %v2234 = vunpack.c.h.b16 %v2175
        %v2235 = vunpack.c.l.b16 %v2176
        %v2236 = vunpack.c.h.b16 %v2176
        %v2237 = vpack.c.b16 %v2207, %v2205
        %v2238 = vpack.c.b16 %v2208, %v2206
        %v2239 = vpack.c.b16 %v2211, %v2209
        %v2240 = vpack.c.b16 %v2212, %v2210
        %v2241 = vpack.c.b16 %v2215, %v2213
        %v2242 = vpack.c.b16 %v2216, %v2214
        %v2243 = vpack.c.b16 %v2219, %v2217
        %v2244 = vpack.c.b16 %v2220, %v2218
        %v2245 = vpack.c.b16 %v2223, %v2221
        %v2246 = vpack.c.b16 %v2224, %v2222
        %v2247 = vpack.c.b16 %v2227, %v2225
        %v2248 = vpack.c.b16 %v2228, %v2226
        %v2249 = vpack.c.b16 %v2231, %v2229
        %v2250 = vpack.c.b16 %v2232, %v2230
        %v2251 = vpack.c.b16 %v2235, %v2233
        %v2252 = vpack.c.b16 %v2236, %v2234
        %2269 = vmatprep.subr.bf16.mxu0 %v2238
        %2270 = vmatpush1.bf16.msra.mxu0 %v2237
        %2271 = vmatprep.subr.bf16.mxu0 %v2240
        %2272 = vmatpush1.bf16.msra.mxu0 %v2239
        %2273 = vmatprep.subr.bf16.mxu0 %v2242
        %2274 = vmatpush1.bf16.msra.mxu0 %v2241
        %2275 = vmatprep.subr.bf16.mxu0 %v2244
        %2276 = vmatpush1.bf16.msra.mxu0 %v2243
        %2277 = vmatprep.subr.bf16.mxu0 %v2246
        %2278 = vmatpush1.bf16.msra.mxu0 %v2245
        %2279 = vmatprep.subr.bf16.mxu0 %v2248
        %2280 = vmatpush1.bf16.msra.mxu0 %v2247
        %2281 = vmatprep.subr.bf16.mxu0 %v2250
        %2282 = vmatpush1.bf16.msra.mxu0 %v2249
        %2283 = vmatprep.subr.bf16.mxu0 %v2252
        %2284 = vmatpush1.bf16.msra.mxu0 %v2251
        %2285 = vmatprep.subr.bf16.mxu0 0
        %2286 = vmatpush1.bf16.msra.mxu0 0
        %2287 = vmatprep.subr.bf16.mxu0 0
        %2288 = vmatpush1.bf16.msra.mxu0 0
        %2289 = vmatprep.subr.bf16.mxu0 0
        %2290 = vmatpush1.bf16.msra.mxu0 0
        %2291 = vmatprep.subr.bf16.mxu0 0
        %2292 = vmatpush1.bf16.msra.mxu0 0
        %2293 = vmatprep.subr.bf16.mxu0 0
        %2294 = vmatpush1.bf16.msra.mxu0 0
        %2295 = vmatprep.subr.bf16.mxu0 0
        %2296 = vmatpush1.bf16.msra.mxu0 0
        %2297 = vmatprep.subr.bf16.mxu0 0
        %2298 = vmatpush1.bf16.msra.mxu0 0
        %2299 = vmatprep.subr.bf16.mxu0 0
        %2300 = vmatpush1.bf16.msra.mxu0 0
        %2301 = vmatprep.mubr.bf16.mxu0 0
        %2302 = vmatmul.mubr.bf16.gmra.mrb[0].mxu0 %v2160
        %v2303 = vpop.f32.mrb[0].mxu0
        %v2304 = vadd.f32 %v2182, %v2303
        %v2305 = vpop.f32.mrb[0].mxu0
        %v2306 = vadd.f32 %v2186, %v2305
        %v2307 = vpop.f32.mrb[0].mxu0
        %v2308 = vpop.f32.mrb[0].mxu0
        %2309 = vdwg.mxu0
        %v2310 = vmul.f32 %v2304, 0.5
        %v2311 = vmul.f32 %v2306, 0.5
        %v2312 = vmul.f32 %v2304, 0.044715
        %v2313 = vmul.f32 %v2306, 0.044715
        %v2314 = vmul.f32 %v2312, %v2304
        %v2315 = vmul.f32 %v2313, %v2306
        %v2316 = vmul.f32 %v2314, %v2304
        %v2317 = vmul.f32 %v2315, %v2306
        %v2318 = vadd.f32 %v2304, %v2316
        %v2319 = vadd.f32 %v2306, %v2317
        %v2320 = vmul.f32 %v2318, 0.7978846
        %v2321 = vmul.f32 %v2319, 0.7978846
        %v2322 = vtanh.pop %v2320
        %v2323 = vtanh.pop %v2321
        %v2324 = vadd.f32 %v2322, 1.0
        %v2325 = vadd.f32 %v2323, 1.0
        %v2326 = vmul.f32 %v2310, %v2324
        %v2327 = vmul.f32 %v2311, %v2325
        %v2328 = vpack.c.bf16 %v2326, %v2326
        %v2329 = vpack.c.bf16 %v2327, %v2327
        %v2330 = vld [vmem:[%s959] sm:$0xf]
        %v2331 = vld [vmem:[%s959 + $0x4] sm:$0xf]
        %v2332 = vld [vmem:[%s959 + $0x8] sm:$0xf]
        %v2333 = vld [vmem:[%s959 + $0xc] sm:$0xf]
        %v2334 = vld [vmem:[%s959 + $0x10] sm:$0xf]
        %v2335 = vld [vmem:[%s959 + $0x14] sm:$0xf]
        %v2336 = vld [vmem:[%s959 + $0x18] sm:$0xf]
        %v2337 = vld [vmem:[%s959 + $0x1c] sm:$0xf]
        %v2338 = vld [vmem:[%s959 + $0x20] sm:$0xf]
        %v2339 = vld [vmem:[%s959 + $0x24] sm:$0xf]
        %v2340 = vld [vmem:[%s959 + $0x28] sm:$0xf]
        %v2341 = vld [vmem:[%s959 + $0x2c] sm:$0xf]
        %v2342 = vld [vmem:[%s959 + $0x30] sm:$0xf]
        %v2343 = vld [vmem:[%s959 + $0x34] sm:$0xf]
        %v2344 = vld [vmem:[%s959 + $0x38] sm:$0xf]
        %v2345 = vld [vmem:[%s959 + $0x3c] sm:$0xf]
        %v2346 = vld [vmem:[%s959 + $0x40] sm:$0xf]
        %v2347 = vld [vmem:[%s959 + $0x44] sm:$0xf]
        %v2348 = vld [vmem:[%s959 + $0x48] sm:$0xf]
        %v2349 = vld [vmem:[%s959 + $0x4c] sm:$0xf]
        %v2350 = vld [vmem:[%s959 + $0x50] sm:$0xf]
        %v2351 = vld [vmem:[%s959 + $0x54] sm:$0xf]
        %v2352 = vld [vmem:[%s959 + $0x58] sm:$0xf]
        %v2353 = vld [vmem:[%s959 + $0x5c] sm:$0xf]
        %v2354 = vld [vmem:[%s959 + $0x60] sm:$0xf]
        %v2355 = vld [vmem:[%s959 + $0x64] sm:$0xf]
        %v2356 = vld [vmem:[%s959 + $0x68] sm:$0xf]
        %v2357 = vld [vmem:[%s959 + $0x6c] sm:$0xf]
        %v2358 = vld [vmem:[%s959 + $0x70] sm:$0xf]
        %v2359 = vld [vmem:[%s959 + $0x74] sm:$0xf]
        %v2360 = vld [vmem:[%s959 + $0x78] sm:$0xf]
        %v2361 = vld [vmem:[%s959 + $0x7c] sm:$0xf]
        %v2362 = vld [vmem:[%s962] sm:$0x1]
        %v2364 = vlaneseq
        %v2365 = vshrl.u32 %v2364, 7
        %v2366 = vsub.s32 0, %v2365
        %v2367 = vrot.slane %v2362, %v2366
        %v2401 = vunpack.c.l.b16 %v2330
        %v2402 = vunpack.c.l.b16 %v2331
        %v2403 = vunpack.c.l.b16 %v2332
        %v2404 = vunpack.c.l.b16 %v2333
        %v2405 = vunpack.c.l.b16 %v2334
        %v2406 = vunpack.c.l.b16 %v2335
        %v2407 = vunpack.c.l.b16 %v2336
        %v2408 = vunpack.c.l.b16 %v2337
        %v2409 = vunpack.c.l.b16 %v2338
        %v2410 = vunpack.c.l.b16 %v2339
        %v2411 = vunpack.c.l.b16 %v2340
        %v2412 = vunpack.c.l.b16 %v2341
        %v2413 = vunpack.c.l.b16 %v2342
        %v2414 = vunpack.c.l.b16 %v2343
        %v2415 = vunpack.c.l.b16 %v2344
        %v2416 = vunpack.c.l.b16 %v2345
        %v2417 = vunpack.c.l.b16 %v2346
        %v2418 = vunpack.c.l.b16 %v2347
        %v2419 = vunpack.c.l.b16 %v2348
        %v2420 = vunpack.c.l.b16 %v2349
        %v2421 = vunpack.c.l.b16 %v2350
        %v2422 = vunpack.c.l.b16 %v2351
        %v2423 = vunpack.c.l.b16 %v2352
        %v2424 = vunpack.c.l.b16 %v2353
        %v2425 = vunpack.c.l.b16 %v2354
        %v2426 = vunpack.c.l.b16 %v2355
        %v2427 = vunpack.c.l.b16 %v2356
        %v2428 = vunpack.c.l.b16 %v2357
        %v2429 = vunpack.c.l.b16 %v2358
        %v2430 = vunpack.c.l.b16 %v2359
        %v2431 = vunpack.c.l.b16 %v2360
        %v2432 = vunpack.c.l.b16 %v2361
        %v2433 = vpack.c.b16 %v2402, %v2401
        %v2434 = vpack.c.b16 %v2404, %v2403
        %v2435 = vpack.c.b16 %v2406, %v2405
        %v2436 = vpack.c.b16 %v2408, %v2407
        %v2437 = vpack.c.b16 %v2410, %v2409
        %v2438 = vpack.c.b16 %v2412, %v2411
        %v2439 = vpack.c.b16 %v2414, %v2413
        %v2440 = vpack.c.b16 %v2416, %v2415
        %v2441 = vpack.c.b16 %v2418, %v2417
        %v2442 = vpack.c.b16 %v2420, %v2419
        %v2443 = vpack.c.b16 %v2422, %v2421
        %v2444 = vpack.c.b16 %v2424, %v2423
        %v2445 = vpack.c.b16 %v2426, %v2425
        %v2446 = vpack.c.b16 %v2428, %v2427
        %v2447 = vpack.c.b16 %v2430, %v2429
        %v2448 = vpack.c.b16 %v2432, %v2431
        %2465 = vmatprep.subr.bf16.mxu0 0
        %2466 = vmatpush1.bf16.msra.mxu0 %v2433
        %2467 = vmatprep.subr.bf16.mxu0 0
        %2468 = vmatpush1.bf16.msra.mxu0 %v2434
        %2469 = vmatprep.subr.bf16.mxu0 0
        %2470 = vmatpush1.bf16.msra.mxu0 %v2435
        %2471 = vmatprep.subr.bf16.mxu0 0
        %2472 = vmatpush1.bf16.msra.mxu0 %v2436
        %2473 = vmatprep.subr.bf16.mxu0 0
        %2474 = vmatpush1.bf16.msra.mxu0 %v2437
        %2475 = vmatprep.subr.bf16.mxu0 0
        %2476 = vmatpush1.bf16.msra.mxu0 %v2438
        %2477 = vmatprep.subr.bf16.mxu0 0
        %2478 = vmatpush1.bf16.msra.mxu0 %v2439
        %2479 = vmatprep.subr.bf16.mxu0 0
        %2480 = vmatpush1.bf16.msra.mxu0 %v2440
        %2481 = vmatprep.subr.bf16.mxu0 0
        %2482 = vmatpush1.bf16.msra.mxu0 %v2441
        %2483 = vmatprep.subr.bf16.mxu0 0
        %2484 = vmatpush1.bf16.msra.mxu0 %v2442
        %2485 = vmatprep.subr.bf16.mxu0 0
        %2486 = vmatpush1.bf16.msra.mxu0 %v2443
        %2487 = vmatprep.subr.bf16.mxu0 0
        %2488 = vmatpush1.bf16.msra.mxu0 %v2444
        %2489 = vmatprep.subr.bf16.mxu0 0
        %2490 = vmatpush1.bf16.msra.mxu0 %v2445
        %2491 = vmatprep.subr.bf16.mxu0 0
        %2492 = vmatpush1.bf16.msra.mxu0 %v2446
        %2493 = vmatprep.subr.bf16.mxu0 0
        %2494 = vmatpush1.bf16.msra.mxu0 %v2447
        %2495 = vmatprep.subr.bf16.mxu0 0
        %2496 = vmatpush1.bf16.msra.mxu0 %v2448
        %2497 = vmatprep.mubr.bf16.mxu0 %v2329
        %2498 = vmatmul.mubr.bf16.gmra.mrb[0].mxu0 %v2328
        %v2499 = vpop.f32.mrb[0].mxu0
        %v2500 = vadd.f32 %v2367, %v2499
        %v2501 = vpop.f32.mrb[0].mxu0
        %v2502 = vpop.f32.mrb[0].mxu0
        %v2503 = vpop.f32.mrb[0].mxu0
        %2504 = vdwg.mxu0
        %v2505 = vadd.f32 %v2132, %v2500
        %2506 = vst [vmem:[#allocation2] sm:$0xff] %v2505
        %p2507 = scmp.eq.s32.totalorder %s41, 1
        // Predicated region
        $region113: #{tpu_custom_call.1} parent=107 // pred_check
          %p2508 = pneg %p2507
        $region114: #{tpu_custom_call.1} parent=107 // pred_check_branch
          %2510 = sbr.rel (%p2508) target = $region116
        $region115: #{tpu_custom_call.1} parent=107 // pred_region
          %v2511 = vld [vmem:[%s20] sm:$0x1]
          %v2512 = vld [vmem:[%s21] sm:$0x1]
          %2513 = vadd.xlane.f32.xlu0 %v2505
          %v2514 = vpop.xlane.xlu0 %2513
          %v2515 = vmul.f32 %v2514, %v1061
          %v2516 = vsub.f32 %v2505, %v2515
          %v2517 = vmul.f32 %v2516, %v2516
          %2518 = vadd.xlane.f32.xlu0 %v2517
          %v2519 = vpop.xlane.xlu0 %2518
          %v2520 = vmul.f32 %v2519, %v1061
          %v2521 = vadd.f32 %v2520, 1e-12
          %v2522 = vrsqrt.pop %v2521
          %v2523 = vmul.f32 %v2516, %v2522
          %v2525 = vlaneseq
          %v2526 = vshrl.u32 %v2525, 7
          %v2527 = vsub.s32 0, %v2526
          %v2528 = vrot.slane %v2511, %v2527
          %v2530 = vmul.f32 %v2523, %v2528
          %v2532 = vlaneseq
          %v2533 = vshrl.u32 %v2532, 7
          %v2534 = vsub.s32 0, %v2533
          %v2535 = vrot.slane %v2512, %v2534
          %v2537 = vadd.f32 %v2530, %v2535
          %2538 = vst [vmem:[%s894] sm:$0xff] %v2537
        $region116: #{tpu_custom_call.1} parent=107 // pred_fallthru
          _
        %s2539 = sand.u32 %s603, 1
        %s2540 = scalar_lea.sflag [#allocation4], %s2539
        %s2541 = sand.u32 %s603, 1
        %s2542 = smul.addr %s2541, 8
        %s2543 = scalar_lea.vmem [#allocation3], %s2542
        // Predicated region
        $region117: #{tpu_custom_call.1} parent=107 // pred_check
          %p2544 = pneg %p613
        $region118: #{tpu_custom_call.1} parent=107 // pred_check_branch
          %2546 = sbr.rel (%p2544) target = $region120
        $region119: #{tpu_custom_call.1} parent=107 // pred_region
          %s2548 = ssub.s32 128, 128
          %2549 = vsyncadd %s2540, %s2548
          %s2550 = smul.addr %s40, 128
          %s2551 = scalar_lea.hbm %s22, %s2550
          %s2553 = sshll.u32 %s2543, 4
          %s2554 = int_to_ptr.vmem [resolvable:$true] %s2553
          %2556 = dma.vmem_to_hbm [thread:$0]  %s2554, 128, %s2551, %s2540
        $region120: #{tpu_custom_call.1} parent=107 // pred_fallthru
          _
      $region108: #{tpu_custom_call.1} parent=5 // pred_fallthru
        _
      %p2557 = scmp.le.s32.totalorder 2, %s31
      // Predicated region
      $region121: #{tpu_custom_call.1} parent=5 // pred_check
        %p2558 = pneg %p2557
      $region122: #{tpu_custom_call.1} parent=5 // pred_check_branch
        %2560 = sbr.rel (%p2558) target = $region124
      $region123: #{tpu_custom_call.1} parent=5 // pred_region
        %s2561 = ssub.s32 %s31, 2
        // Predicated region
        $region125: #{tpu_custom_call.1} parent=123 // pred_check
          %p2562 = pneg %p619
        $region126: #{tpu_custom_call.1} parent=123 // pred_check_branch
          %2564 = sbr.rel (%p2562) target = $region128
        $region127: #{tpu_custom_call.1} parent=123 // pred_region
          %s2565 = sand.u32 %s604, 1
          %s2566 = scalar_lea.sflag [#allocation4], %s2565
          %s2567 = sand.u32 %s604, 1
          %s2568 = smul.addr %s2567, 8
          %s2569 = scalar_lea.vmem [#allocation3], %s2568
          %2570 = dma.done %s2566, 128
        $region128: #{tpu_custom_call.1} parent=123 // pred_fallthru
          _
      $region124: #{tpu_custom_call.1} parent=5 // pred_fallthru
        _
    $region6: #{tpu_custom_call.1} parent=1 // loop_footer
      %s35 = sadd.s32 1, %s31
    $region7: #{tpu_custom_call.1} parent=1 // loop_footer_branch
      %30 = sbr.rel target = $region3
    $region8: #{tpu_custom_call.1} parent=1 // loop_exit
      _
    %2571 = vsyncpa [#allocation4], 1
    %s2572 = scalar_lea.sflag [#allocation4], 1
    %2573 = vsyncpa %s2572, 1

</llo_original>
